<compile_context>
chip_gen: v7x
topology: tpu7x:2x2x1
jax: 0.10.0
libtpu: 0.0.40
codegen_flags: <defaults>
</compile_context>

<pallas_src>
import functools
import math

import jax
import jax.numpy as jnp
from jax.experimental import pallas as pl
from jax.experimental.pallas import tpu as pltpu


def _round_up(v, m):
    return (v + m - 1) // m * m


def _gelu_tanh(x):
    # matches nn.GELU(approximate='tanh')
    c = math.sqrt(2.0 / math.pi)
    return 0.5 * x * (1.0 + jnp.tanh(c * (x + 0.044715 * x * x * x)))


# ------------------------------ fused Pallas kernel ------------------------------

def _fused_encoder_kernel(x_ref, kb_ref, lnf_ref, lnp_ref,
                          qkvw_ref, qkvb_ref, outw_ref,
                          fcw_ref, fcb_ref, pw_ref,
                          o_ref, *, e_real, n_head, hd):
    layer = pl.program_id(1)
    n_layer = pl.num_programs(1)

    # Layer 0: bring this sample's (row/lane padded) activations into the resident
    # output block; later layers read/modify it in place (stays in VMEM).
    @pl.when(layer == 0)
    def _():
        o_ref[...] = x_ref[...]

    x = o_ref[0]                                   # (S_pad, E_pad) float32
    e_pad = x.shape[-1]
    inv_e = 1.0 / float(e_real)

    # 1.0 on real embedding lanes, 0.0 on padding lanes.
    lane_ok = (jax.lax.broadcasted_iota(jnp.int32, (1, e_pad), 1)
               < e_real).astype(jnp.float32)

    def layer_norm(v, w, b):
        # statistics over the real E columns only (padding lanes stay zero).
        mu = jnp.sum(v, axis=-1, keepdims=True) * inv_e
        d = (v - mu) * lane_ok
        var = jnp.sum(d * d, axis=-1, keepdims=True) * inv_e
        return d * jax.lax.rsqrt(var + 1e-5) * w + b

    lnp = lnp_ref[0]                               # (6, E_pad) packed vectors
    ln1_w, ln1_b = lnp[0:1], lnp[1:2]
    ln2_w, ln2_b = lnp[2:3], lnp[3:4]
    out_b, proj_b = lnp[4:5], lnp[5:6]

    kbias = kb_ref[0]                              # (1, S_pad) additive key bias

    # -------------- attention branch: x + out_proj(MHA(LN1(x))) --------------
    h1 = layer_norm(x, ln1_w, ln1_b)
    # fused lane-dense QKV projection (1/sqrt(hd) already folded into Q weights)
    qkv = jnp.dot(h1.astype(jnp.bfloat16), qkvw_ref[0],
                  preferred_element_type=jnp.float32) + qkvb_ref[0]

    # per-head attention (the K=hd contraction is inherent; projections above are
    # already lane-dense).  Heads unrolled at trace time.
    ctx_parts = []
    for h in range(n_head):
        qh = qkv[:, h * hd:(h + 1) * hd]
        kh = qkv[:, e_real + h * hd:e_real + (h + 1) * hd]
        vh = qkv[:, 2 * e_real + h * hd:2 * e_real + (h + 1) * hd]
        s = jax.lax.dot_general(qh, kh, (((1,), (1,)), ((), ())),
                                preferred_element_type=jnp.float32)   # q @ k^T
        s = s + kbias                              # key padding / row padding mask
        s = s - jnp.max(s, axis=-1, keepdims=True)
        p = jnp.exp(s)
        p = p / jnp.sum(p, axis=-1, keepdims=True)
        ctx_parts.append(jnp.dot(p, vh, preferred_element_type=jnp.float32))
    ctx = jnp.concatenate(ctx_parts, axis=-1)      # (S_pad, E) head-concat in lanes

    # single output projection; the head reduction happens inside the MXU (K = E).
    attn = jnp.dot(ctx.astype(jnp.bfloat16), outw_ref[0],
                   preferred_element_type=jnp.float32) + out_b
    x = x + attn

    # ---------------- MLP branch: x + proj(gelu(fc(LN2(x)))) ----------------
    h2 = layer_norm(x, ln2_w, ln2_b)
    ff = jnp.dot(h2.astype(jnp.bfloat16), fcw_ref[0],
                 preferred_element_type=jnp.float32) + fcb_ref[0]
    ff = _gelu_tanh(ff)
    ff = jnp.dot(ff.astype(jnp.bfloat16), pw_ref[0],
                 preferred_element_type=jnp.float32) + proj_b
    x = x + ff

    @pl.when(layer < n_layer - 1)
    def _():
        o_ref[0] = x                               # carry to next layer in VMEM

    @pl.when(layer == n_layer - 1)
    def _():
        lnf = lnf_ref[...]                         # (2, E_pad): final LN w / b
        o_ref[0] = layer_norm(x, lnf[0:1], lnf[1:2])


# ---------------------------- wrapper (layout + call) ----------------------------

def _vmem_limit_bytes():
    # Explicit scoped-VMEM limit (defaults: 16/32 MiB).  Cap at 3/4 of the chip's
    # physical VMEM so it is also safe on v7x (64 MiB).
    try:
        cap = pltpu.get_tpu_info().vmem_capacity_bytes
    except Exception:
        cap = 64 * 1024 * 1024
    return int(min(cap * 3 // 4, 100 * 1024 * 1024))


def _prepare_inputs(x, key_padding_mask, params, n_head):
    """Pad activations, build the per-sample additive key bias, and pack / cast
    the per-layer weights into lane-dense bf16 slabs."""
    B, S, E = x.shape
    hd = E // n_head
    S_pad = _round_up(S, 8)
    E_pad = _round_up(E, 128)
    QKV_pad = _round_up(3 * E, 256)      # multiples of 256 for the 2x256 MXU
    HID_pad = _round_up(4 * E, 256)

    def pad_last(a, new):
        return jnp.pad(a, [(0, 0)] * (a.ndim - 1) + [(0, new - a.shape[-1])])

    xp = jnp.pad(x.astype(jnp.float32),
                 ((0, 0), (0, S_pad - S), (0, E_pad - E)))        # (B,S_pad,E_pad)

    if key_padding_mask is None:
        key_padding_mask = jnp.ones((B, S), jnp.float32)
    keep = jnp.pad(key_padding_mask.astype(jnp.float32),
                   ((0, 0), (0, S_pad - S)))                      # padded rows -> 0
    keybias = jnp.where(keep > 0.0, 0.0, -1e30).astype(jnp.float32)[:, None, :]

    scale = 1.0 / math.sqrt(hd)

    lnp, qkvw, qkvb, outw, fcw, fcb, pw = ([] for _ in range(7))
    for p in params["layers"]:
        lnp.append(jnp.concatenate([
            pad_last(p["ln1_w"], E_pad), pad_last(p["ln1_b"], E_pad),
            pad_last(p["ln2_w"], E_pad), pad_last(p["ln2_b"], E_pad),
            pad_last(p["out_b"], E_pad), pad_last(p["proj_b"], E_pad)],
            axis=0))                                              # (6, E_pad)

        w = p["qkv_wT"].at[:, :E].multiply(scale)   # fold 1/sqrt(hd) into Q cols
        qkvw.append(jnp.pad(w, ((0, E_pad - E), (0, QKV_pad - 3 * E)))
                    .astype(jnp.bfloat16))                        # (E_pad, QKV_pad)
        b = p["qkv_b"].at[:, :E].multiply(scale)
        qkvb.append(pad_last(b, QKV_pad))                         # (1, QKV_pad) f32

        outw.append(pad_last(p["out_wT"], E_pad).astype(jnp.bfloat16))  # (E, E_pad)
        fcw.append(jnp.pad(p["fc_wT"], ((0, E_pad - E), (0, HID_pad - 4 * E)))
                   .astype(jnp.bfloat16))                         # (E_pad, HID_pad)
        fcb.append(pad_last(p["fc_b"], HID_pad))                  # (1, HID_pad) f32
        pw.append(jnp.pad(p["proj_wT"], ((0, HID_pad - 4 * E), (0, E_pad - E)))
                  .astype(jnp.bfloat16))                          # (HID_pad, E_pad)

    stk = lambda xs: jnp.stack(xs, axis=0)
    lnf = jnp.concatenate([pad_last(params["ln_f_w"], E_pad),
                           pad_last(params["ln_f_b"], E_pad)], axis=0)  # (2, E_pad)
    return (xp, keybias, lnf, stk(lnp), stk(qkvw), stk(qkvb), stk(outw),
            stk(fcw), stk(fcb), stk(pw))


def encoder_forward(x, key_padding_mask, params, n_head):
    """x: (B, S, E) f32; key_padding_mask: (B, S) with 1 = attend, 0 = masked key
    (or None)."""
    B, S, E = x.shape
    assert E % n_head == 0
    hd = E // n_head
    S_pad = _round_up(S, 8)
    E_pad = _round_up(E, 128)
    QKV_pad = _round_up(3 * E, 256)
    HID_pad = _round_up(4 * E, 256)
    L = len(params["layers"])

    args = _prepare_inputs(x, key_padding_mask, params, n_head)

    idx_b = lambda b, l: (b, 0, 0)     # per-sample blocks (constant across layers)
    idx_l = lambda b, l: (l, 0, 0)     # per-layer streamed weights
    idx_c = lambda b, l: (0, 0)        # shared constants

    in_specs = [
        pl.BlockSpec((1, S_pad, E_pad), idx_b),        # x (padded)
        pl.BlockSpec((1, 1, S_pad), idx_b),            # additive key bias
        pl.BlockSpec((2, E_pad), idx_c),               # final LN weight / bias
        pl.BlockSpec((1, 6, E_pad), idx_l),            # packed LN / bias vectors
        pl.BlockSpec((1, E_pad, QKV_pad), idx_l),      # fused QKV weight (bf16)
        pl.BlockSpec((1, 1, QKV_pad), idx_l),          # fused QKV bias
        pl.BlockSpec((1, E, E_pad), idx_l),            # out-proj weight (bf16)
        pl.BlockSpec((1, E_pad, HID_pad), idx_l),      # fc weight (bf16)
        pl.BlockSpec((1, 1, HID_pad), idx_l),          # fc bias
        pl.BlockSpec((1, HID_pad, E_pad), idx_l),      # proj weight (bf16)
    ]

    kernel = functools.partial(_fused_encoder_kernel,
                               e_real=E, n_head=n_head, hd=hd)
    out = pl.pallas_call(
        kernel,
        out_shape=jax.ShapeDtypeStruct((B, S_pad, E_pad), jnp.float32),
        grid=(B, L),
        in_specs=in_specs,
        out_specs=pl.BlockSpec((1, S_pad, E_pad), idx_b),  # resident across layers
        compiler_params=pltpu.CompilerParams(
            dimension_semantics=("parallel", "arbitrary"),
            vmem_limit_bytes=_vmem_limit_bytes()),
    )(*args)

    return out[:, :S, :E]


# ------------------------ pure-JAX reference (for checking) ------------------------

def _layernorm_ref(x, w, b):
    mu = jnp.mean(x, axis=-1, keepdims=True)
    var = jnp.mean((x - mu) ** 2, axis=-1, keepdims=True)
    return (x - mu) * jax.lax.rsqrt(var + 1e-5) * w + b


def _ref_block(x, mask_row, p, n_head):
    S, E = x.shape
    hd = E // n_head
    h = _layernorm_ref(x, p["ln1_w"], p["ln1_b"])
    qkv = h @ p["qkv_wT"] + p["qkv_b"]
    q, k, v = qkv[:, :E], qkv[:, E:2 * E], qkv[:, 2 * E:]
    outs = []
    for hi in range(n_head):
        sl = slice(hi * hd, (hi + 1) * hd)
        s = (q[:, sl] @ k[:, sl].T) / math.sqrt(hd)
        s = jnp.where(mask_row > 0.0, s, -1e30)
        outs.append(jax.nn.softmax(s, axis=-1) @ v[:, sl])
    attn = jnp.concatenate(outs, axis=-1) @ p["out_wT"] + p["out_b"]
    x = x + attn
    h2 = _layernorm_ref(x, p["ln2_w"], p["ln2_b"])
    ff = _gelu_tanh(h2 @ p["fc_wT"] + p["fc_b"]) @ p["proj_wT"] + p["proj_b"]
    return x + ff


def encoder_reference(x, key_padding_mask, params, n_head):
    B, S, _ = x.shape
    if key_padding_mask is None:
        key_padding_mask = jnp.ones((B, S), jnp.float32)
    mask3 = key_padding_mask.astype(jnp.float32).reshape(B, 1, S)
    y = x
    for p in params["layers"]:
        y = jax.vmap(lambda xb, mb: _ref_block(xb, mb, p, n_head))(y, mask3)
    return jax.vmap(lambda xb: _layernorm_ref(xb, params["ln_f_w"],
                                              params["ln_f_b"]))(y)


# ---------------------------------- parameter init ----------------------------------

def init_params(key, n_layer, n_embd):
    E = n_embd
    layers = []
    for _ in range(n_layer):
        key, *ks = jax.random.split(key, 9)
        layers.append({
            "ln1_w": jnp.ones((1, E), jnp.float32),
            "ln1_b": jnp.zeros((1, E), jnp.float32),
            # weights stored pre-transposed (in_features, out_features) for x @ W^T
            "qkv_wT": 0.02 * jax.random.normal(ks[0], (E, 3 * E), jnp.float32),
            "qkv_b": 0.02 * jax.random.normal(ks[1], (1, 3 * E), jnp.float32),
            "out_wT": 0.02 * jax.random.normal(ks[2], (E, E), jnp.float32),
            "out_b": 0.02 * jax.random.normal(ks[3], (1, E), jnp.float32),
            "ln2_w": jnp.ones((1, E), jnp.float32),
            "ln2_b": jnp.zeros((1, E), jnp.float32),
            "fc_wT": 0.02 * jax.random.normal(ks[4], (E, 4 * E), jnp.float32),
            "fc_b": 0.02 * jax.random.normal(ks[5], (1, 4 * E), jnp.float32),
            "proj_wT": 0.02 * jax.random.normal(ks[6], (4 * E, E), jnp.float32),
            "proj_b": 0.02 * jax.random.normal(ks[7], (1, E), jnp.float32),
        })
    return {
        "layers": layers,
        "ln_f_w": jnp.ones((1, E), jnp.float32),
        "ln_f_b": jnp.zeros((1, E), jnp.float32),
    }


# -------------------------------------- main --------------------------------------

if __name__ == "__main__":
    B, S, E = 2, 8, 32
    n_head, n_layer = 4, 2

    key = jax.random.PRNGKey(0)
    kx, kp = jax.random.split(key)
    x = jax.random.normal(kx, (B, S, E), jnp.float32)
    params = init_params(kp, n_layer, E)

    # bf16 MXU operands vs f32 reference -> bf16-level tolerance.
    tol = dict(atol=1e-2, rtol=1e-2)

    # case 1: no key padding mask (same as PyTorch key_padding_mask=None)
    out = jax.block_until_ready(encoder_forward(x, None, params, n_head))
    ref = jax.block_until_ready(encoder_reference(x, None, params, n_head))
    assert out.shape == (B, S, E)
    assert jnp.allclose(out, ref, **tol), "mismatch (mask=None)"

    # case 2: non-trivial key padding mask (1 = attend, 0 = padded key)
    mask = jnp.ones((B, S), jnp.float32).at[1, S - 2:].set(0.0)
    out_m = jax.block_until_ready(encoder_forward(x, mask, params, n_head))
    ref_m = jax.block_until_ready(encoder_reference(x, mask, params, n_head))
    assert jnp.allclose(out_m, ref_m, **tol), "mismatch (masked)"

    print("KERNEL_OK")
</pallas_src>

<mosaic_0001>
module attributes {stable_mosaic.version = 11 : i64} {
  func.func @_fused_encoder_kernel(%arg0: i32, %arg1: i32, %arg2: memref<1x8x128xf32, #tpu.memory_space<vmem>>, %arg3: memref<1x1x8xf32, #tpu.memory_space<vmem>>, %arg4: memref<2x128xf32, #tpu.memory_space<vmem>>, %arg5: memref<1x6x128xf32, #tpu.memory_space<vmem>>, %arg6: memref<1x128x256xbf16, #tpu.memory_space<vmem>>, %arg7: memref<1x1x256xf32, #tpu.memory_space<vmem>>, %arg8: memref<1x32x128xbf16, #tpu.memory_space<vmem>>, %arg9: memref<1x128x256xbf16, #tpu.memory_space<vmem>>, %arg10: memref<1x1x256xf32, #tpu.memory_space<vmem>>, %arg11: memref<1x256x128xbf16, #tpu.memory_space<vmem>>, %arg12: memref<1x8x128xf32, #tpu.memory_space<vmem>>) attributes {dimension_semantics = [#tpu.dimension_semantics<parallel>, #tpu.dimension_semantics<arbitrary>], iteration_bounds = array<i64: 2, 2>, scalar_prefetch = 0 : i64, scratch_operands = 0 : i64, tpu.core_type = #tpu.core_type<tc>, window_params = [{transform_indices = @transform_0, window_bounds = array<i64: 1, 8, 128>}, {transform_indices = @transform_1, window_bounds = array<i64: 1, 1, 8>}, {pipeline_mode = #tpu.pipeline_mode<synchronous>, transform_indices = @transform_2, window_bounds = array<i64: 2, 128>}, {transform_indices = @transform_3, window_bounds = array<i64: 1, 6, 128>}, {transform_indices = @transform_4, window_bounds = array<i64: 1, 128, 256>}, {transform_indices = @transform_5, window_bounds = array<i64: 1, 1, 256>}, {transform_indices = @transform_6, window_bounds = array<i64: 1, 32, 128>}, {transform_indices = @transform_7, window_bounds = array<i64: 1, 128, 256>}, {transform_indices = @transform_8, window_bounds = array<i64: 1, 1, 256>}, {transform_indices = @transform_9, window_bounds = array<i64: 1, 256, 128>}, {transform_indices = @transform_10, window_bounds = array<i64: 1, 8, 128>}]} {
    %c0_i32 = arith.constant 0 : i32
    %0 = arith.cmpi eq, %arg1, %c0_i32 : i32
    %1 = arith.extui %0 : i1 to i32
    %c0_i32_0 = arith.constant 0 : i32
    %2 = arith.cmpi ne, %1, %c0_i32_0 : i32
    scf.if %2 {
      %c0_63 = arith.constant 0 : index
      %c0_64 = arith.constant 0 : index
      %c0_65 = arith.constant 0 : index
      %178 = vector.load %arg2[%c0_63, %c0_64, %c0_65] : memref<1x8x128xf32, #tpu.memory_space<vmem>>, vector<1x8x128xf32>
      %c0_66 = arith.constant 0 : index
      %c0_67 = arith.constant 0 : index
      %c0_68 = arith.constant 0 : index
      %179 = vector.load %arg12[%c0_66, %c0_67, %c0_68] : memref<1x8x128xf32, #tpu.memory_space<vmem>>, vector<1x8x128xf32>
      tpu.vector_store %arg12[%c0_66, %c0_67, %c0_68], %178 {strides = array<i32>} : memref<1x8x128xf32, #tpu.memory_space<vmem>>, vector<1x8x128xf32>,
    } else {
    }
    %c0 = arith.constant 0 : index
    %c0_1 = arith.constant 0 : index
    %c0_2 = arith.constant 0 : index
    %3 = vector.load %arg12[%c0, %c0_1, %c0_2] : memref<1x8x128xf32, #tpu.memory_space<vmem>>, vector<1x8x128xf32>
    %4 = vector.shape_cast %3 : vector<1x8x128xf32> to vector<8x128xf32>
    %5 = tpu.iota {dimensions = array<i32: 1>} : vector<1x128xi32>
    %c32_i32 = arith.constant 32 : i32
    %6 = vector.broadcast %c32_i32 : i32 to vector<1x128xi32>
    %7 = arith.cmpi slt, %5, %6 : vector<1x128xi32>
    %8 = arith.extui %7 : vector<1x128xi1> to vector<1x128xi32>
    %9 = arith.sitofp %8 : vector<1x128xi32> to vector<1x128xf32>
    %c0_3 = arith.constant 0 : index
    %c0_4 = arith.constant 0 : index
    %c0_5 = arith.constant 0 : index
    %10 = vector.load %arg5[%c0_3, %c0_4, %c0_5] : memref<1x6x128xf32, #tpu.memory_space<vmem>>, vector<1x6x128xf32>
    %11 = vector.shape_cast %10 : vector<1x6x128xf32> to vector<6x128xf32>
    %12 = vector.extract_strided_slice %11 {offsets = [0, 0], sizes = [1, 128], strides = [1, 1]} : vector<6x128xf32> to vector<1x128xf32>
    %13 = vector.extract_strided_slice %11 {offsets = [1, 0], sizes = [1, 128], strides = [1, 1]} : vector<6x128xf32> to vector<1x128xf32>
    %14 = vector.extract_strided_slice %11 {offsets = [2, 0], sizes = [1, 128], strides = [1, 1]} : vector<6x128xf32> to vector<1x128xf32>
    %15 = vector.extract_strided_slice %11 {offsets = [3, 0], sizes = [1, 128], strides = [1, 1]} : vector<6x128xf32> to vector<1x128xf32>
    %16 = vector.extract_strided_slice %11 {offsets = [4, 0], sizes = [1, 128], strides = [1, 1]} : vector<6x128xf32> to vector<1x128xf32>
    %17 = vector.extract_strided_slice %11 {offsets = [5, 0], sizes = [1, 128], strides = [1, 1]} : vector<6x128xf32> to vector<1x128xf32>
    %c0_6 = arith.constant 0 : index
    %c0_7 = arith.constant 0 : index
    %c0_8 = arith.constant 0 : index
    %18 = vector.load %arg3[%c0_6, %c0_7, %c0_8] : memref<1x1x8xf32, #tpu.memory_space<vmem>>, vector<1x1x8xf32>
    %19 = vector.shape_cast %18 : vector<1x1x8xf32> to vector<1x8xf32>
    %cst = arith.constant dense<0.000000e+00> : vector<8xf32>
    %20 = vector.multi_reduction <add>, %4, %cst [1] : vector<8x128xf32> to vector<8xf32>
    %21 = vector.shape_cast %20 : vector<8xf32> to vector<8x1xf32>
    %cst_9 = arith.constant 3.125000e-02 : f32
    %22 = vector.broadcast %cst_9 : f32 to vector<8x1xf32>
    %23 = arith.mulf %21, %22 : vector<8x1xf32>
    %24 = vector.broadcast %23 : vector<8x1xf32> to vector<8x128xf32>
    %25 = arith.subf %4, %24 : vector<8x128xf32>
    %26 = vector.broadcast %9 : vector<1x128xf32> to vector<8x128xf32>
    %27 = arith.mulf %25, %26 : vector<8x128xf32>
    %28 = arith.mulf %27, %27 : vector<8x128xf32>
    %cst_10 = arith.constant dense<0.000000e+00> : vector<8xf32>
    %29 = vector.multi_reduction <add>, %28, %cst_10 [1] : vector<8x128xf32> to vector<8xf32>
    %30 = vector.shape_cast %29 : vector<8xf32> to vector<8x1xf32>
    %cst_11 = arith.constant 3.125000e-02 : f32
    %31 = vector.broadcast %cst_11 : f32 to vector<8x1xf32>
    %32 = arith.mulf %30, %31 : vector<8x1xf32>
    %cst_12 = arith.constant 9.99999974E-6 : f32
    %33 = vector.broadcast %cst_12 : f32 to vector<8x1xf32>
    %34 = arith.addf %32, %33 : vector<8x1xf32>
    %35 = math.rsqrt %34 : vector<8x1xf32>
    %36 = vector.broadcast %35 : vector<8x1xf32> to vector<8x128xf32>
    %37 = arith.mulf %27, %36 : vector<8x128xf32>
    %38 = vector.broadcast %12 : vector<1x128xf32> to vector<8x128xf32>
    %39 = arith.mulf %37, %38 : vector<8x128xf32>
    %40 = vector.broadcast %13 : vector<1x128xf32> to vector<8x128xf32>
    %41 = arith.addf %39, %40 : vector<8x128xf32>
    %42 = arith.truncf %41 : vector<8x128xf32> to vector<8x128xbf16>
    %c0_13 = arith.constant 0 : index
    %c0_14 = arith.constant 0 : index
    %c0_15 = arith.constant 0 : index
    %43 = vector.load %arg6[%c0_13, %c0_14, %c0_15] : memref<1x128x256xbf16, #tpu.memory_space<vmem>>, vector<1x128x256xbf16>
    %44 = vector.shape_cast %43 : vector<1x128x256xbf16> to vector<128x256xbf16>
    %cst_16 = arith.constant dense<0.000000e+00> : vector<8x256xf32>
    %45 = tpu.matmul %42, %44, %cst_16 {dimension_numbers = #tpu.dot_dimension_numbers<[1], [0], [0], [1], [0, 0, 1, 1], [], []>} : vector<8x128xbf16>, vector<128x256xbf16>, vector<8x256xf32> -> vector<8x256xf32>
    %c0_17 = arith.constant 0 : index
    %c0_18 = arith.constant 0 : index
    %c0_19 = arith.constant 0 : index
    %46 = vector.load %arg7[%c0_17, %c0_18, %c0_19] : memref<1x1x256xf32, #tpu.memory_space<vmem>>, vector<1x1x256xf32>
    %47 = vector.shape_cast %46 : vector<1x1x256xf32> to vector<1x256xf32>
    %48 = vector.broadcast %47 : vector<1x256xf32> to vector<8x256xf32>
    %49 = arith.addf %45, %48 : vector<8x256xf32>
    %50 = vector.extract_strided_slice %49 {offsets = [0, 0], sizes = [8, 8], strides = [1, 1]} : vector<8x256xf32> to vector<8x8xf32>
    %51 = vector.extract_strided_slice %49 {offsets = [0, 32], sizes = [8, 8], strides = [1, 1]} : vector<8x256xf32> to vector<8x8xf32>
    %52 = vector.extract_strided_slice %49 {offsets = [0, 64], sizes = [8, 8], strides = [1, 1]} : vector<8x256xf32> to vector<8x8xf32>
    %cst_20 = arith.constant dense<0.000000e+00> : vector<8x8xf32>
    %53 = tpu.matmul %50, %51, %cst_20 {dimension_numbers = #tpu.dot_dimension_numbers<[1], [1], [0], [0], [0, 0, 1, 0], [], []>} : vector<8x8xf32>, vector<8x8xf32>, vector<8x8xf32> -> vector<8x8xf32>
    %54 = vector.broadcast %19 : vector<1x8xf32> to vector<8x8xf32>
    %55 = arith.addf %53, %54 : vector<8x8xf32>
    %cst_21 = arith.constant dense<0xFF800000> : vector<8xf32>
    %56 = vector.multi_reduction <maximumf>, %55, %cst_21 [1] : vector<8x8xf32> to vector<8xf32>
    %57 = vector.shape_cast %56 : vector<8xf32> to vector<8x1xf32>
    %58 = vector.broadcast %57 : vector<8x1xf32> to vector<8x8xf32>
    %59 = arith.subf %55, %58 : vector<8x8xf32>
    %60 = math.exp %59 : vector<8x8xf32>
    %cst_22 = arith.constant dense<0.000000e+00> : vector<8xf32>
    %61 = vector.multi_reduction <add>, %60, %cst_22 [1] : vector<8x8xf32> to vector<8xf32>
    %62 = vector.shape_cast %61 : vector<8xf32> to vector<8x1xf32>
    %63 = vector.broadcast %62 : vector<8x1xf32> to vector<8x8xf32>
    %64 = arith.divf %60, %63 : vector<8x8xf32>
    %cst_23 = arith.constant dense<0.000000e+00> : vector<8x8xf32>
    %65 = tpu.matmul %64, %52, %cst_23 {dimension_numbers = #tpu.dot_dimension_numbers<[1], [0], [0], [1], [0, 0, 1, 1], [], []>} : vector<8x8xf32>, vector<8x8xf32>, vector<8x8xf32> -> vector<8x8xf32>
    %66 = vector.extract_strided_slice %49 {offsets = [0, 8], sizes = [8, 8], strides = [1, 1]} : vector<8x256xf32> to vector<8x8xf32>
    %67 = vector.extract_strided_slice %49 {offsets = [0, 40], sizes = [8, 8], strides = [1, 1]} : vector<8x256xf32> to vector<8x8xf32>
    %68 = vector.extract_strided_slice %49 {offsets = [0, 72], sizes = [8, 8], strides = [1, 1]} : vector<8x256xf32> to vector<8x8xf32>
    %cst_24 = arith.constant dense<0.000000e+00> : vector<8x8xf32>
    %69 = tpu.matmul %66, %67, %cst_24 {dimension_numbers = #tpu.dot_dimension_numbers<[1], [1], [0], [0], [0, 0, 1, 0], [], []>} : vector<8x8xf32>, vector<8x8xf32>, vector<8x8xf32> -> vector<8x8xf32>
    %70 = vector.broadcast %19 : vector<1x8xf32> to vector<8x8xf32>
    %71 = arith.addf %69, %70 : vector<8x8xf32>
    %cst_25 = arith.constant dense<0xFF800000> : vector<8xf32>
    %72 = vector.multi_reduction <maximumf>, %71, %cst_25 [1] : vector<8x8xf32> to vector<8xf32>
    %73 = vector.shape_cast %72 : vector<8xf32> to vector<8x1xf32>
    %74 = vector.broadcast %73 : vector<8x1xf32> to vector<8x8xf32>
    %75 = arith.subf %71, %74 : vector<8x8xf32>
    %76 = math.exp %75 : vector<8x8xf32>
    %cst_26 = arith.constant dense<0.000000e+00> : vector<8xf32>
    %77 = vector.multi_reduction <add>, %76, %cst_26 [1] : vector<8x8xf32> to vector<8xf32>
    %78 = vector.shape_cast %77 : vector<8xf32> to vector<8x1xf32>
    %79 = vector.broadcast %78 : vector<8x1xf32> to vector<8x8xf32>
    %80 = arith.divf %76, %79 : vector<8x8xf32>
    %cst_27 = arith.constant dense<0.000000e+00> : vector<8x8xf32>
    %81 = tpu.matmul %80, %68, %cst_27 {dimension_numbers = #tpu.dot_dimension_numbers<[1], [0], [0], [1], [0, 0, 1, 1], [], []>} : vector<8x8xf32>, vector<8x8xf32>, vector<8x8xf32> -> vector<8x8xf32>
    %82 = vector.extract_strided_slice %49 {offsets = [0, 16], sizes = [8, 8], strides = [1, 1]} : vector<8x256xf32> to vector<8x8xf32>
    %83 = vector.extract_strided_slice %49 {offsets = [0, 48], sizes = [8, 8], strides = [1, 1]} : vector<8x256xf32> to vector<8x8xf32>
    %84 = vector.extract_strided_slice %49 {offsets = [0, 80], sizes = [8, 8], strides = [1, 1]} : vector<8x256xf32> to vector<8x8xf32>
    %cst_28 = arith.constant dense<0.000000e+00> : vector<8x8xf32>
    %85 = tpu.matmul %82, %83, %cst_28 {dimension_numbers = #tpu.dot_dimension_numbers<[1], [1], [0], [0], [0, 0, 1, 0], [], []>} : vector<8x8xf32>, vector<8x8xf32>, vector<8x8xf32> -> vector<8x8xf32>
    %86 = vector.broadcast %19 : vector<1x8xf32> to vector<8x8xf32>
    %87 = arith.addf %85, %86 : vector<8x8xf32>
    %cst_29 = arith.constant dense<0xFF800000> : vector<8xf32>
    %88 = vector.multi_reduction <maximumf>, %87, %cst_29 [1] : vector<8x8xf32> to vector<8xf32>
    %89 = vector.shape_cast %88 : vector<8xf32> to vector<8x1xf32>
    %90 = vector.broadcast %89 : vector<8x1xf32> to vector<8x8xf32>
    %91 = arith.subf %87, %90 : vector<8x8xf32>
    %92 = math.exp %91 : vector<8x8xf32>
    %cst_30 = arith.constant dense<0.000000e+00> : vector<8xf32>
    %93 = vector.multi_reduction <add>, %92, %cst_30 [1] : vector<8x8xf32> to vector<8xf32>
    %94 = vector.shape_cast %93 : vector<8xf32> to vector<8x1xf32>
    %95 = vector.broadcast %94 : vector<8x1xf32> to vector<8x8xf32>
    %96 = arith.divf %92, %95 : vector<8x8xf32>
    %cst_31 = arith.constant dense<0.000000e+00> : vector<8x8xf32>
    %97 = tpu.matmul %96, %84, %cst_31 {dimension_numbers = #tpu.dot_dimension_numbers<[1], [0], [0], [1], [0, 0, 1, 1], [], []>} : vector<8x8xf32>, vector<8x8xf32>, vector<8x8xf32> -> vector<8x8xf32>
    %98 = vector.extract_strided_slice %49 {offsets = [0, 24], sizes = [8, 8], strides = [1, 1]} : vector<8x256xf32> to vector<8x8xf32>
    %99 = vector.extract_strided_slice %49 {offsets = [0, 56], sizes = [8, 8], strides = [1, 1]} : vector<8x256xf32> to vector<8x8xf32>
    %100 = vector.extract_strided_slice %49 {offsets = [0, 88], sizes = [8, 8], strides = [1, 1]} : vector<8x256xf32> to vector<8x8xf32>
    %cst_32 = arith.constant dense<0.000000e+00> : vector<8x8xf32>
    %101 = tpu.matmul %98, %99, %cst_32 {dimension_numbers = #tpu.dot_dimension_numbers<[1], [1], [0], [0], [0, 0, 1, 0], [], []>} : vector<8x8xf32>, vector<8x8xf32>, vector<8x8xf32> -> vector<8x8xf32>
    %102 = vector.broadcast %19 : vector<1x8xf32> to vector<8x8xf32>
    %103 = arith.addf %101, %102 : vector<8x8xf32>
    %cst_33 = arith.constant dense<0xFF800000> : vector<8xf32>
    %104 = vector.multi_reduction <maximumf>, %103, %cst_33 [1] : vector<8x8xf32> to vector<8xf32>
    %105 = vector.shape_cast %104 : vector<8xf32> to vector<8x1xf32>
    %106 = vector.broadcast %105 : vector<8x1xf32> to vector<8x8xf32>
    %107 = arith.subf %103, %106 : vector<8x8xf32>
    %108 = math.exp %107 : vector<8x8xf32>
    %cst_34 = arith.constant dense<0.000000e+00> : vector<8xf32>
    %109 = vector.multi_reduction <add>, %108, %cst_34 [1] : vector<8x8xf32> to vector<8xf32>
    %110 = vector.shape_cast %109 : vector<8xf32> to vector<8x1xf32>
    %111 = vector.broadcast %110 : vector<8x1xf32> to vector<8x8xf32>
    %112 = arith.divf %108, %111 : vector<8x8xf32>
    %cst_35 = arith.constant dense<0.000000e+00> : vector<8x8xf32>
    %113 = tpu.matmul %112, %100, %cst_35 {dimension_numbers = #tpu.dot_dimension_numbers<[1], [0], [0], [1], [0, 0, 1, 1], [], []>} : vector<8x8xf32>, vector<8x8xf32>, vector<8x8xf32> -> vector<8x8xf32>
    %114 = tpu.concatenate %65, %81, %97, %113 in 1 : vector<8x8xf32>, vector<8x8xf32>, vector<8x8xf32>, vector<8x8xf32> -> vector<8x32xf32>
    %115 = arith.truncf %114 : vector<8x32xf32> to vector<8x32xbf16>
    %c0_36 = arith.constant 0 : index
    %c0_37 = arith.constant 0 : index
    %c0_38 = arith.constant 0 : index
    %116 = vector.load %arg8[%c0_36, %c0_37, %c0_38] : memref<1x32x128xbf16, #tpu.memory_space<vmem>>, vector<1x32x128xbf16>
    %117 = vector.shape_cast %116 : vector<1x32x128xbf16> to vector<32x128xbf16>
    %cst_39 = arith.constant dense<0.000000e+00> : vector<8x128xf32>
    %118 = tpu.matmul %115, %117, %cst_39 {dimension_numbers = #tpu.dot_dimension_numbers<[1], [0], [0], [1], [0, 0, 1, 1], [], []>} : vector<8x32xbf16>, vector<32x128xbf16>, vector<8x128xf32> -> vector<8x128xf32>
    %119 = vector.broadcast %16 : vector<1x128xf32> to vector<8x128xf32>
    %120 = arith.addf %118, %119 : vector<8x128xf32>
    %121 = arith.addf %4, %120 : vector<8x128xf32>
    %cst_40 = arith.constant dense<0.000000e+00> : vector<8xf32>
    %122 = vector.multi_reduction <add>, %121, %cst_40 [1] : vector<8x128xf32> to vector<8xf32>
    %123 = vector.shape_cast %122 : vector<8xf32> to vector<8x1xf32>
    %cst_41 = arith.constant 3.125000e-02 : f32
    %124 = vector.broadcast %cst_41 : f32 to vector<8x1xf32>
    %125 = arith.mulf %123, %124 : vector<8x1xf32>
    %126 = vector.broadcast %125 : vector<8x1xf32> to vector<8x128xf32>
    %127 = arith.subf %121, %126 : vector<8x128xf32>
    %128 = vector.broadcast %9 : vector<1x128xf32> to vector<8x128xf32>
    %129 = arith.mulf %127, %128 : vector<8x128xf32>
    %130 = arith.mulf %129, %129 : vector<8x128xf32>
    %cst_42 = arith.constant dense<0.000000e+00> : vector<8xf32>
    %131 = vector.multi_reduction <add>, %130, %cst_42 [1] : vector<8x128xf32> to vector<8xf32>
    %132 = vector.shape_cast %131 : vector<8xf32> to vector<8x1xf32>
    %cst_43 = arith.constant 3.125000e-02 : f32
    %133 = vector.broadcast %cst_43 : f32 to vector<8x1xf32>
    %134 = arith.mulf %132, %133 : vector<8x1xf32>
    %cst_44 = arith.constant 9.99999974E-6 : f32
    %135 = vector.broadcast %cst_44 : f32 to vector<8x1xf32>
    %136 = arith.addf %134, %135 : vector<8x1xf32>
    %137 = math.rsqrt %136 : vector<8x1xf32>
    %138 = vector.broadcast %137 : vector<8x1xf32> to vector<8x128xf32>
    %139 = arith.mulf %129, %138 : vector<8x128xf32>
    %140 = vector.broadcast %14 : vector<1x128xf32> to vector<8x128xf32>
    %141 = arith.mulf %139, %140 : vector<8x128xf32>
    %142 = vector.broadcast %15 : vector<1x128xf32> to vector<8x128xf32>
    %143 = arith.addf %141, %142 : vector<8x128xf32>
    %144 = arith.truncf %143 : vector<8x128xf32> to vector<8x128xbf16>
    %c0_45 = arith.constant 0 : index
    %c0_46 = arith.constant 0 : index
    %c0_47 = arith.constant 0 : index
    %145 = vector.load %arg9[%c0_45, %c0_46, %c0_47] : memref<1x128x256xbf16, #tpu.memory_space<vmem>>, vector<1x128x256xbf16>
    %146 = vector.shape_cast %145 : vector<1x128x256xbf16> to vector<128x256xbf16>
    %cst_48 = arith.constant dense<0.000000e+00> : vector<8x256xf32>
    %147 = tpu.matmul %144, %146, %cst_48 {dimension_numbers = #tpu.dot_dimension_numbers<[1], [0], [0], [1], [0, 0, 1, 1], [], []>} : vector<8x128xbf16>, vector<128x256xbf16>, vector<8x256xf32> -> vector<8x256xf32>
    %c0_49 = arith.constant 0 : index
    %c0_50 = arith.constant 0 : index
    %c0_51 = arith.constant 0 : index
    %148 = vector.load %arg10[%c0_49, %c0_50, %c0_51] : memref<1x1x256xf32, #tpu.memory_space<vmem>>, vector<1x1x256xf32>
    %149 = vector.shape_cast %148 : vector<1x1x256xf32> to vector<1x256xf32>
    %150 = vector.broadcast %149 : vector<1x256xf32> to vector<8x256xf32>
    %151 = arith.addf %147, %150 : vector<8x256xf32>
    %cst_52 = arith.constant 5.000000e-01 : f32
    %152 = vector.broadcast %cst_52 : f32 to vector<8x256xf32>
    %153 = arith.mulf %152, %151 : vector<8x256xf32>
    %cst_53 = arith.constant 4.471500e-02 : f32
    %154 = vector.broadcast %cst_53 : f32 to vector<8x256xf32>
    %155 = arith.mulf %154, %151 : vector<8x256xf32>
    %156 = arith.mulf %155, %151 : vector<8x256xf32>
    %157 = arith.mulf %156, %151 : vector<8x256xf32>
    %158 = arith.addf %151, %157 : vector<8x256xf32>
    %cst_54 = arith.constant 0.797884583 : f32
    %159 = vector.broadcast %cst_54 : f32 to vector<8x256xf32>
    %160 = arith.mulf %159, %158 : vector<8x256xf32>
    %161 = math.tanh %160 : vector<8x256xf32>
    %cst_55 = arith.constant 1.000000e+00 : f32
    %162 = vector.broadcast %cst_55 : f32 to vector<8x256xf32>
    %163 = arith.addf %162, %161 : vector<8x256xf32>
    %164 = arith.mulf %153, %163 : vector<8x256xf32>
    %165 = arith.truncf %164 : vector<8x256xf32> to vector<8x256xbf16>
    %c0_56 = arith.constant 0 : index
    %c0_57 = arith.constant 0 : index
    %c0_58 = arith.constant 0 : index
    %166 = vector.load %arg11[%c0_56, %c0_57, %c0_58] : memref<1x256x128xbf16, #tpu.memory_space<vmem>>, vector<1x256x128xbf16>
    %167 = vector.shape_cast %166 : vector<1x256x128xbf16> to vector<256x128xbf16>
    %cst_59 = arith.constant dense<0.000000e+00> : vector<8x128xf32>
    %168 = tpu.matmul %165, %167, %cst_59 {dimension_numbers = #tpu.dot_dimension_numbers<[1], [0], [0], [1], [0, 0, 1, 1], [], []>} : vector<8x256xbf16>, vector<256x128xbf16>, vector<8x128xf32> -> vector<8x128xf32>
    %169 = vector.broadcast %17 : vector<1x128xf32> to vector<8x128xf32>
    %170 = arith.addf %168, %169 : vector<8x128xf32>
    %171 = arith.addf %121, %170 : vector<8x128xf32>
    %c1_i32 = arith.constant 1 : i32
    %172 = arith.cmpi slt, %arg1, %c1_i32 : i32
    %173 = arith.extui %172 : i1 to i32
    %c0_i32_60 = arith.constant 0 : i32
    %174 = arith.cmpi ne, %173, %c0_i32_60 : i32
    scf.if %174 {
      %c0_63 = arith.constant 0 : index
      %c0_64 = arith.constant 0 : index
      %c0_65 = arith.constant 0 : index
      %178 = vector.load %arg12[%c0_63, %c0_64, %c0_65] : memref<1x8x128xf32, #tpu.memory_space<vmem>>, vector<1x8x128xf32>
      %179 = vector.shape_cast %178 : vector<1x8x128xf32> to vector<8x128xf32>
      %180 = vector.shape_cast %171 : vector<8x128xf32> to vector<1x8x128xf32>
      tpu.vector_store %arg12[%c0_63, %c0_64, %c0_65], %180 {strides = array<i32>} : memref<1x8x128xf32, #tpu.memory_space<vmem>>, vector<1x8x128xf32>,
    } else {
    }
    %c1_i32_61 = arith.constant 1 : i32
    %175 = arith.cmpi eq, %arg1, %c1_i32_61 : i32
    %176 = arith.extui %175 : i1 to i32
    %c0_i32_62 = arith.constant 0 : i32
    %177 = arith.cmpi ne, %176, %c0_i32_62 : i32
    scf.if %177 {
      %c0_63 = arith.constant 0 : index
      %c0_64 = arith.constant 0 : index
      %178 = vector.load %arg4[%c0_63, %c0_64] : memref<2x128xf32, #tpu.memory_space<vmem>>, vector<2x128xf32>
      %179 = vector.extract_strided_slice %178 {offsets = [0, 0], sizes = [1, 128], strides = [1, 1]} : vector<2x128xf32> to vector<1x128xf32>
      %180 = vector.extract_strided_slice %178 {offsets = [1, 0], sizes = [1, 128], strides = [1, 1]} : vector<2x128xf32> to vector<1x128xf32>
      %cst_65 = arith.constant dense<0.000000e+00> : vector<8xf32>
      %181 = vector.multi_reduction <add>, %171, %cst_65 [1] : vector<8x128xf32> to vector<8xf32>
      %182 = vector.shape_cast %181 : vector<8xf32> to vector<8x1xf32>
      %cst_66 = arith.constant 3.125000e-02 : f32
      %183 = vector.broadcast %cst_66 : f32 to vector<8x1xf32>
      %184 = arith.mulf %182, %183 : vector<8x1xf32>
      %185 = vector.broadcast %184 : vector<8x1xf32> to vector<8x128xf32>
      %186 = arith.subf %171, %185 : vector<8x128xf32>
      %187 = vector.broadcast %9 : vector<1x128xf32> to vector<8x128xf32>
      %188 = arith.mulf %186, %187 : vector<8x128xf32>
      %189 = arith.mulf %188, %188 : vector<8x128xf32>
      %cst_67 = arith.constant dense<0.000000e+00> : vector<8xf32>
      %190 = vector.multi_reduction <add>, %189, %cst_67 [1] : vector<8x128xf32> to vector<8xf32>
      %191 = vector.shape_cast %190 : vector<8xf32> to vector<8x1xf32>
      %cst_68 = arith.constant 3.125000e-02 : f32
      %192 = vector.broadcast %cst_68 : f32 to vector<8x1xf32>
      %193 = arith.mulf %191, %192 : vector<8x1xf32>
      %cst_69 = arith.constant 9.99999974E-6 : f32
      %194 = vector.broadcast %cst_69 : f32 to vector<8x1xf32>
      %195 = arith.addf %193, %194 : vector<8x1xf32>
      %196 = math.rsqrt %195 : vector<8x1xf32>
      %197 = vector.broadcast %196 : vector<8x1xf32> to vector<8x128xf32>
      %198 = arith.mulf %188, %197 : vector<8x128xf32>
      %199 = vector.broadcast %179 : vector<1x128xf32> to vector<8x128xf32>
      %200 = arith.mulf %198, %199 : vector<8x128xf32>
      %201 = vector.broadcast %180 : vector<1x128xf32> to vector<8x128xf32>
      %202 = arith.addf %200, %201 : vector<8x128xf32>
      %c0_70 = arith.constant 0 : index
      %c0_71 = arith.constant 0 : index
      %c0_72 = arith.constant 0 : index
      %203 = vector.load %arg12[%c0_70, %c0_71, %c0_72] : memref<1x8x128xf32, #tpu.memory_space<vmem>>, vector<1x8x128xf32>
      %204 = vector.shape_cast %203 : vector<1x8x128xf32> to vector<8x128xf32>
      %205 = vector.shape_cast %202 : vector<8x128xf32> to vector<1x8x128xf32>
      tpu.vector_store %arg12[%c0_70, %c0_71, %c0_72], %205 {strides = array<i32>} : memref<1x8x128xf32, #tpu.memory_space<vmem>>, vector<1x8x128xf32>,
    } else {
    }
    return
  }
  func.func @transform_0(%arg0: i32, %arg1: i32) -> (i32, i32, i32) {
    %c0_i32 = arith.constant 0 : i32
    %c0_i32_0 = arith.constant 0 : i32
    %c0_i32_1 = arith.constant 0 : i32
    return %arg0, %c0_i32, %c0_i32_0 : i32, i32, i32
  }
  func.func @transform_1(%arg0: i32, %arg1: i32) -> (i32, i32, i32) {
    %c0_i32 = arith.constant 0 : i32
    %c0_i32_0 = arith.constant 0 : i32
    %c0_i32_1 = arith.constant 0 : i32
    return %arg0, %c0_i32, %c0_i32_0 : i32, i32, i32
  }
  func.func @transform_2(%arg0: i32, %arg1: i32) -> (i32, i32) {
    %c0_i32 = arith.constant 0 : i32
    %c0_i32_0 = arith.constant 0 : i32
    %c0_i32_1 = arith.constant 0 : i32
    return %c0_i32, %c0_i32_0 : i32, i32
  }
  func.func @transform_3(%arg0: i32, %arg1: i32) -> (i32, i32, i32) {
    %c0_i32 = arith.constant 0 : i32
    %c0_i32_0 = arith.constant 0 : i32
    %c0_i32_1 = arith.constant 0 : i32
    return %arg1, %c0_i32, %c0_i32_0 : i32, i32, i32
  }
  func.func @transform_4(%arg0: i32, %arg1: i32) -> (i32, i32, i32) {
    %c0_i32 = arith.constant 0 : i32
    %c0_i32_0 = arith.constant 0 : i32
    %c0_i32_1 = arith.constant 0 : i32
    return %arg1, %c0_i32, %c0_i32_0 : i32, i32, i32
  }
  func.func @transform_5(%arg0: i32, %arg1: i32) -> (i32, i32, i32) {
    %c0_i32 = arith.constant 0 : i32
    %c0_i32_0 = arith.constant 0 : i32
    %c0_i32_1 = arith.constant 0 : i32
    return %arg1, %c0_i32, %c0_i32_0 : i32, i32, i32
  }
  func.func @transform_6(%arg0: i32, %arg1: i32) -> (i32, i32, i32) {
    %c0_i32 = arith.constant 0 : i32
    %c0_i32_0 = arith.constant 0 : i32
    %c0_i32_1 = arith.constant 0 : i32
    return %arg1, %c0_i32, %c0_i32_0 : i32, i32, i32
  }
  func.func @transform_7(%arg0: i32, %arg1: i32) -> (i32, i32, i32) {
    %c0_i32 = arith.constant 0 : i32
    %c0_i32_0 = arith.constant 0 : i32
    %c0_i32_1 = arith.constant 0 : i32
    return %arg1, %c0_i32, %c0_i32_0 : i32, i32, i32
  }
  func.func @transform_8(%arg0: i32, %arg1: i32) -> (i32, i32, i32) {
    %c0_i32 = arith.constant 0 : i32
    %c0_i32_0 = arith.constant 0 : i32
    %c0_i32_1 = arith.constant 0 : i32
    return %arg1, %c0_i32, %c0_i32_0 : i32, i32, i32
  }
  func.func @transform_9(%arg0: i32, %arg1: i32) -> (i32, i32, i32) {
    %c0_i32 = arith.constant 0 : i32
    %c0_i32_0 = arith.constant 0 : i32
    %c0_i32_1 = arith.constant 0 : i32
    return %arg1, %c0_i32, %c0_i32_0 : i32, i32, i32
  }
  func.func @transform_10(%arg0: i32, %arg1: i32) -> (i32, i32, i32) {
    %c0_i32 = arith.constant 0 : i32
    %c0_i32_0 = arith.constant 0 : i32
    %c0_i32_1 = arith.constant 0 : i32
    return %arg0, %c0_i32, %c0_i32_0 : i32, i32, i32
  }
}

</mosaic_0001>

<llo_original>
// kernel: tpu_custom_call.1
$region0: #{tpu_custom_call.1}
  #allocation0 [shape = 'u32[]', space=smem, size = 0x4, offset = 0x4, fixed_abs, tag = 'smem constant byte address 0x4 - core index']
  #allocation1 [shape = 'u32[144,128]{1,0:T(1,128)}', space=vmem, size = 0x12000, scoped, tag = 'internal scratch']
  %s0 = inlined_call_operand.vmem [shape: f32[2,8,128], index: 0, kind: input, shape index: {}]
  %s1 = inlined_call_operand.vmem [shape: f32[2,1,8], index: 1, kind: input, shape index: {}]
  %s2 = inlined_call_operand.hbm [shape: f32[2,128], index: 2, kind: input, shape index: {}]
  %s3 = inlined_call_operand.vmem [shape: f32[2,6,128], index: 3, kind: input, shape index: {}]
  %s4 = inlined_call_operand.hbm [shape: bf16[2,128,256], index: 4, kind: input, shape index: {}]
  %s5 = inlined_call_operand.hbm [shape: f32[2,1,256], index: 5, kind: input, shape index: {}]
  %s6 = inlined_call_operand.vmem [shape: bf16[2,32,128], index: 6, kind: input, shape index: {}]
  %s7 = inlined_call_operand.hbm [shape: bf16[2,128,256], index: 7, kind: input, shape index: {}]
  %s8 = inlined_call_operand.vmem [shape: f32[2,1,256], index: 8, kind: input, shape index: {}]
  %s9 = inlined_call_operand.hbm [shape: bf16[2,256,128], index: 9, kind: input, shape index: {}]
  %s10 = inlined_call_operand.hbm [shape: f32[2,8,128], index: 10, kind: output, shape index: {}]
  %s11 = sld [smem:[#allocation0]]
  $region105: #{tpu_custom_call.1} parent=0
    _
  %s13 = ssub.s32 1, %s11
  %s14 = scalar_select 0, %s13, %s11
  $region1: #{tpu_custom_call.1} parent=0
    #allocation2 [shape = 'u8[1024]{0}', space=vmem, size = 0x400, scoped, tag = 'input window, operand 2, single buffered']
    #allocation3 [shape = 's32[2]{0}', space=sflag, size = 0x8, scoped, tag = 'scoped memory for tpu_custom_call.1']
    #allocation4 [shape = 's32[2]{0}', space=sflag, size = 0x8, scoped, tag = 'scoped memory for tpu_custom_call.1']
    #allocation5 [shape = 'u8[131072]{0}', space=vmem, size = 0x20000, scoped, tag = 'input window, operand 4']
    #allocation6 [shape = 's32[2]{0}', space=sflag, size = 0x8, scoped, tag = 'scoped memory for tpu_custom_call.1']
    #allocation7 [shape = 'u8[2048]{0}', space=vmem, size = 0x800, scoped, tag = 'input window, operand 5']
    #allocation8 [shape = 'u8[131072]{0}', space=vmem, size = 0x20000, scoped, tag = 'input window, operand 7']
    #allocation9 [shape = 's32[2]{0}', space=sflag, size = 0x8, scoped, tag = 'scoped memory for tpu_custom_call.1']
    #allocation10 [shape = 'u8[131072]{0}', space=vmem, size = 0x20000, scoped, tag = 'input window, operand 9']
    #allocation11 [shape = 'u8[8192]{0}', space=vmem, size = 0x2000, scoped, tag = 'output window, operand 0']
    %15 = vsyncpa [#allocation3], 0
    %16 = vsyncpa [#allocation6], 0
    %s17 = scalar_lea.sflag [#allocation6], 1
    %18 = vsyncpa %s17, 0
    %19 = vsyncpa [#allocation9], 0
    %s20 = scalar_lea.sflag [#allocation9], 1
    %21 = vsyncpa %s20, 0
    %22 = vsyncpa [#allocation4], 0
    %s23 = scalar_lea.sflag [#allocation4], 1
    %24 = vsyncpa %s23, 0
    loop: start=0, step=1, limit=6
    $region2: #{tpu_custom_call.1} parent=1 // loop_pre_header
      _
    $region3: #{tpu_custom_call.1} parent=1 // loop_header
      %s26 = sphi 0, %s30
      %p27 = scmp.ge.s32.totalorder %s26, 6
      %s33 = sphi 0, %s45
      %s34 = sphi 0, %s41
      %s35 = sphi 0, %s33
      %s36 = sphi 0, %s34
      %s37 = sphi 0, %s35
      %s38 = sphi 0, %s36
      %s48 = sphi 0, %s50
      %s51 = sphi 0, %s48
      %s52 = sphi 0, %s51
      %s68 = sphi 0, %s52
      %s74 = sphi 0, %s76
      %s77 = sphi 0, %s74
      %s78 = sphi 0, %s77
      %s94 = sphi 0, %s78
      %s98 = sphi 0, %s98
      %s100 = sphi 0, %s98
      %s101 = sphi 0, %s100
      %s115 = sphi 0, %s101
      %s121 = sphi 0, %s123
      %s124 = sphi 0, %s121
      %s125 = sphi 0, %s124
      %s141 = sphi 0, %s125
      %s147 = sphi 0, %s149
      %s150 = sphi 0, %s147
      %s151 = sphi 0, %s150
      %s167 = sphi 0, %s151
      %s173 = sphi 0, %s175
      %s176 = sphi 0, %s173
      %s177 = sphi 0, %s176
      %s193 = sphi 0, %s177
      %s199 = sphi 0, %s201
      %s202 = sphi 0, %s199
      %s203 = sphi 0, %s202
      %s219 = sphi 0, %s203
      %s225 = sphi 0, %s227
      %s228 = sphi 0, %s225
      %s229 = sphi 0, %s228
      %s245 = sphi 0, %s229
      %s251 = sphi 0, %s253
      %s254 = sphi 0, %s251
      %s255 = sphi 0, %s254
      %s271 = sphi 0, %s255
      %s277 = sphi 0, %s279
      %s280 = sphi 0, %s277
      %s281 = sphi 0, %s280
      %s297 = sphi 0, %s281
      %s303 = sphi 0, %s305
      %s306 = sphi 0, %s303
      %s307 = sphi 0, %s306
      %s323 = sphi 0, %s307
    $region4: #{tpu_custom_call.1} parent=1 // loop_header_branch
      %29 = sbr.rel (%p27) target = $region8
    $region5: #{tpu_custom_call.1} parent=1 // loop_body
      %s31 = ssub.s32 %s26, 1
      %s32 = ssub.s32 %s26, 2
      %s39 = sadd.s32 1, %s34
      %p40 = scmp.ge.s32.totalorder %s39, 2
      %s41 = scalar_select %p40, 0, %s39
      %s42 = sadd.s32 1, %s33
      %s43 = scalar_select %p40, %s42, %s33
      %p44 = scmp.ge.s32.totalorder %s43, 2
      %s45 = scalar_select %p44, 0, %s43
      %s46 = ssub.s32 %s33, %s45
      %p47 = scmp.eq.s32.totalorder %s46, 0
      %s49 = sadd.s32 %s48, 1
      %s50 = scalar_select %p47, %s48, %s49
      %p53 = pneg %p47
      %p54 = scmp.eq.s32.totalorder %s26, 3
      %p55 = por %p53, %p54
      %p56 = scmp.ne.s32.totalorder %s48, %s51
      %p57 = scmp.eq.s32.totalorder %s26, 0
      %p58 = por %p56, %p57
      %p59 = scmp.ne.s32.totalorder %s48, %s51
      %p60 = scmp.eq.s32.totalorder %s31, 3
      %p61 = por %p59, %p60
      %p62 = scmp.ne.s32.totalorder %s51, %s52
      %p63 = scmp.eq.s32.totalorder %s31, 0
      %p64 = por %p62, %p63
      %p65 = scmp.ne.s32.totalorder %s51, %s52
      %p66 = scmp.eq.s32.totalorder %s32, 3
      %p67 = por %p65, %p66
      %p69 = scmp.ne.s32.totalorder %s52, %s68
      %p70 = scmp.eq.s32.totalorder %s32, 0
      %p71 = por %p69, %p70
      %s72 = ssub.s32 %s33, %s45
      %p73 = scmp.eq.s32.totalorder %s72, 0
      %s75 = sadd.s32 %s74, 1
      %s76 = scalar_select %p73, %s74, %s75
      %p79 = pneg %p73
      %p80 = scmp.eq.s32.totalorder %s26, 3
      %p81 = por %p79, %p80
      %p82 = scmp.ne.s32.totalorder %s74, %s77
      %p83 = scmp.eq.s32.totalorder %s26, 0
      %p84 = por %p82, %p83
      %p85 = scmp.ne.s32.totalorder %s74, %s77
      %p86 = scmp.eq.s32.totalorder %s31, 3
      %p87 = por %p85, %p86
      %p88 = scmp.ne.s32.totalorder %s77, %s78
      %p89 = scmp.eq.s32.totalorder %s31, 0
      %p90 = por %p88, %p89
      %p91 = scmp.ne.s32.totalorder %s77, %s78
      %p92 = scmp.eq.s32.totalorder %s32, 3
      %p93 = por %p91, %p92
      %p95 = scmp.ne.s32.totalorder %s78, %s94
      %p96 = scmp.eq.s32.totalorder %s32, 0
      %p97 = por %p95, %p96
      %s99 = sadd.s32 %s98, 1
      %p102 = scmp.eq.s32.totalorder %s26, 3
      %p103 = scmp.ne.s32.totalorder %s98, %s100
      %p104 = scmp.eq.s32.totalorder %s26, 0
      %p105 = por %p103, %p104
      %p106 = scmp.ne.s32.totalorder %s98, %s100
      %p107 = scmp.eq.s32.totalorder %s31, 3
      %p108 = por %p106, %p107
      %p109 = scmp.ne.s32.totalorder %s100, %s101
      %p110 = scmp.eq.s32.totalorder %s31, 0
      %p111 = por %p109, %p110
      %p112 = scmp.ne.s32.totalorder %s100, %s101
      %p113 = scmp.eq.s32.totalorder %s32, 3
      %p114 = por %p112, %p113
      %p116 = scmp.ne.s32.totalorder %s101, %s115
      %p117 = scmp.eq.s32.totalorder %s32, 0
      %p118 = por %p116, %p117
      %s119 = ssub.s32 %s34, %s41
      %p120 = scmp.eq.s32.totalorder %s119, 0
      %s122 = sadd.s32 %s121, 1
      %s123 = scalar_select %p120, %s121, %s122
      %p126 = pneg %p120
      %p127 = scmp.eq.s32.totalorder %s26, 3
      %p128 = por %p126, %p127
      %p129 = scmp.ne.s32.totalorder %s121, %s124
      %p130 = scmp.eq.s32.totalorder %s26, 0
      %p131 = por %p129, %p130
      %p132 = scmp.ne.s32.totalorder %s121, %s124
      %p133 = scmp.eq.s32.totalorder %s31, 3
      %p134 = por %p132, %p133
      %p135 = scmp.ne.s32.totalorder %s124, %s125
      %p136 = scmp.eq.s32.totalorder %s31, 0
      %p137 = por %p135, %p136
      %p138 = scmp.ne.s32.totalorder %s124, %s125
      %p139 = scmp.eq.s32.totalorder %s32, 3
      %p140 = por %p138, %p139
      %p142 = scmp.ne.s32.totalorder %s125, %s141
      %p143 = scmp.eq.s32.totalorder %s32, 0
      %p144 = por %p142, %p143
      %s145 = ssub.s32 %s34, %s41
      %p146 = scmp.eq.s32.totalorder %s145, 0
      %s148 = sadd.s32 %s147, 1
      %s149 = scalar_select %p146, %s147, %s148
      %p152 = pneg %p146
      %p153 = scmp.eq.s32.totalorder %s26, 3
      %p154 = por %p152, %p153
      %p155 = scmp.ne.s32.totalorder %s147, %s150
      %p156 = scmp.eq.s32.totalorder %s26, 0
      %p157 = por %p155, %p156
      %p158 = scmp.ne.s32.totalorder %s147, %s150
      %p159 = scmp.eq.s32.totalorder %s31, 3
      %p160 = por %p158, %p159
      %p161 = scmp.ne.s32.totalorder %s150, %s151
      %p162 = scmp.eq.s32.totalorder %s31, 0
      %p163 = por %p161, %p162
      %p164 = scmp.ne.s32.totalorder %s150, %s151
      %p165 = scmp.eq.s32.totalorder %s32, 3
      %p166 = por %p164, %p165
      %p168 = scmp.ne.s32.totalorder %s151, %s167
      %p169 = scmp.eq.s32.totalorder %s32, 0
      %p170 = por %p168, %p169
      %s171 = ssub.s32 %s34, %s41
      %p172 = scmp.eq.s32.totalorder %s171, 0
      %s174 = sadd.s32 %s173, 1
      %s175 = scalar_select %p172, %s173, %s174
      %p178 = pneg %p172
      %p179 = scmp.eq.s32.totalorder %s26, 3
      %p180 = por %p178, %p179
      %p181 = scmp.ne.s32.totalorder %s173, %s176
      %p182 = scmp.eq.s32.totalorder %s26, 0
      %p183 = por %p181, %p182
      %p184 = scmp.ne.s32.totalorder %s173, %s176
      %p185 = scmp.eq.s32.totalorder %s31, 3
      %p186 = por %p184, %p185
      %p187 = scmp.ne.s32.totalorder %s176, %s177
      %p188 = scmp.eq.s32.totalorder %s31, 0
      %p189 = por %p187, %p188
      %p190 = scmp.ne.s32.totalorder %s176, %s177
      %p191 = scmp.eq.s32.totalorder %s32, 3
      %p192 = por %p190, %p191
      %p194 = scmp.ne.s32.totalorder %s177, %s193
      %p195 = scmp.eq.s32.totalorder %s32, 0
      %p196 = por %p194, %p195
      %s197 = ssub.s32 %s34, %s41
      %p198 = scmp.eq.s32.totalorder %s197, 0
      %s200 = sadd.s32 %s199, 1
      %s201 = scalar_select %p198, %s199, %s200
      %p204 = pneg %p198
      %p205 = scmp.eq.s32.totalorder %s26, 3
      %p206 = por %p204, %p205
      %p207 = scmp.ne.s32.totalorder %s199, %s202
      %p208 = scmp.eq.s32.totalorder %s26, 0
      %p209 = por %p207, %p208
      %p210 = scmp.ne.s32.totalorder %s199, %s202
      %p211 = scmp.eq.s32.totalorder %s31, 3
      %p212 = por %p210, %p211
      %p213 = scmp.ne.s32.totalorder %s202, %s203
      %p214 = scmp.eq.s32.totalorder %s31, 0
      %p215 = por %p213, %p214
      %p216 = scmp.ne.s32.totalorder %s202, %s203
      %p217 = scmp.eq.s32.totalorder %s32, 3
      %p218 = por %p216, %p217
      %p220 = scmp.ne.s32.totalorder %s203, %s219
      %p221 = scmp.eq.s32.totalorder %s32, 0
      %p222 = por %p220, %p221
      %s223 = ssub.s32 %s34, %s41
      %p224 = scmp.eq.s32.totalorder %s223, 0
      %s226 = sadd.s32 %s225, 1
      %s227 = scalar_select %p224, %s225, %s226
      %p230 = pneg %p224
      %p231 = scmp.eq.s32.totalorder %s26, 3
      %p232 = por %p230, %p231
      %p233 = scmp.ne.s32.totalorder %s225, %s228
      %p234 = scmp.eq.s32.totalorder %s26, 0
      %p235 = por %p233, %p234
      %p236 = scmp.ne.s32.totalorder %s225, %s228
      %p237 = scmp.eq.s32.totalorder %s31, 3
      %p238 = por %p236, %p237
      %p239 = scmp.ne.s32.totalorder %s228, %s229
      %p240 = scmp.eq.s32.totalorder %s31, 0
      %p241 = por %p239, %p240
      %p242 = scmp.ne.s32.totalorder %s228, %s229
      %p243 = scmp.eq.s32.totalorder %s32, 3
      %p244 = por %p242, %p243
      %p246 = scmp.ne.s32.totalorder %s229, %s245
      %p247 = scmp.eq.s32.totalorder %s32, 0
      %p248 = por %p246, %p247
      %s249 = ssub.s32 %s34, %s41
      %p250 = scmp.eq.s32.totalorder %s249, 0
      %s252 = sadd.s32 %s251, 1
      %s253 = scalar_select %p250, %s251, %s252
      %p256 = pneg %p250
      %p257 = scmp.eq.s32.totalorder %s26, 3
      %p258 = por %p256, %p257
      %p259 = scmp.ne.s32.totalorder %s251, %s254
      %p260 = scmp.eq.s32.totalorder %s26, 0
      %p261 = por %p259, %p260
      %p262 = scmp.ne.s32.totalorder %s251, %s254
      %p263 = scmp.eq.s32.totalorder %s31, 3
      %p264 = por %p262, %p263
      %p265 = scmp.ne.s32.totalorder %s254, %s255
      %p266 = scmp.eq.s32.totalorder %s31, 0
      %p267 = por %p265, %p266
      %p268 = scmp.ne.s32.totalorder %s254, %s255
      %p269 = scmp.eq.s32.totalorder %s32, 3
      %p270 = por %p268, %p269
      %p272 = scmp.ne.s32.totalorder %s255, %s271
      %p273 = scmp.eq.s32.totalorder %s32, 0
      %p274 = por %p272, %p273
      %s275 = ssub.s32 %s34, %s41
      %p276 = scmp.eq.s32.totalorder %s275, 0
      %s278 = sadd.s32 %s277, 1
      %s279 = scalar_select %p276, %s277, %s278
      %p282 = pneg %p276
      %p283 = scmp.eq.s32.totalorder %s26, 3
      %p284 = por %p282, %p283
      %p285 = scmp.ne.s32.totalorder %s277, %s280
      %p286 = scmp.eq.s32.totalorder %s26, 0
      %p287 = por %p285, %p286
      %p288 = scmp.ne.s32.totalorder %s277, %s280
      %p289 = scmp.eq.s32.totalorder %s31, 3
      %p290 = por %p288, %p289
      %p291 = scmp.ne.s32.totalorder %s280, %s281
      %p292 = scmp.eq.s32.totalorder %s31, 0
      %p293 = por %p291, %p292
      %p294 = scmp.ne.s32.totalorder %s280, %s281
      %p295 = scmp.eq.s32.totalorder %s32, 3
      %p296 = por %p294, %p295
      %p298 = scmp.ne.s32.totalorder %s281, %s297
      %p299 = scmp.eq.s32.totalorder %s32, 0
      %p300 = por %p298, %p299
      %s301 = ssub.s32 %s33, %s45
      %p302 = scmp.eq.s32.totalorder %s301, 0
      %s304 = sadd.s32 %s303, 1
      %s305 = scalar_select %p302, %s303, %s304
      %p308 = pneg %p302
      %p309 = scmp.eq.s32.totalorder %s26, 3
      %p310 = por %p308, %p309
      %p311 = scmp.ne.s32.totalorder %s303, %s306
      %p312 = scmp.eq.s32.totalorder %s26, 0
      %p313 = por %p311, %p312
      %p314 = scmp.ne.s32.totalorder %s303, %s306
      %p315 = scmp.eq.s32.totalorder %s31, 3
      %p316 = por %p314, %p315
      %p317 = scmp.ne.s32.totalorder %s306, %s307
      %p318 = scmp.eq.s32.totalorder %s31, 0
      %p319 = por %p317, %p318
      %p320 = scmp.ne.s32.totalorder %s306, %s307
      %p321 = scmp.eq.s32.totalorder %s32, 3
      %p322 = por %p320, %p321
      %p324 = scmp.ne.s32.totalorder %s307, %s323
      %p325 = scmp.eq.s32.totalorder %s32, 0
      %p326 = por %p324, %p325
      %p327 = scmp.le.s32.totalorder 1, %s26
      %p328 = scmp.lt.s32.totalorder %s26, 5
      %p329 = pnand %p327, %p328
      %p330 = pneg %p329
      // Predicated region
      $region9: #{tpu_custom_call.1} parent=5 // pred_check
        _
      $region10: #{tpu_custom_call.1} parent=5 // pred_check_branch
        %332 = sbr.rel (%p329) target = $region12
      $region11: #{tpu_custom_call.1} parent=5 // pred_region
        %s333 = ssub.s32 %s26, 1
        // Predicated region
        $region13: #{tpu_custom_call.1} parent=11 // pred_check
          %p334 = pneg %p111
        $region14: #{tpu_custom_call.1} parent=11 // pred_check_branch
          %336 = sbr.rel (%p334) target = $region16
        $region15: #{tpu_custom_call.1} parent=11 // pred_region
          %s338 = ssub.s32 32, 32
          %339 = vsyncadd [#allocation3], %s338
          %s341 = sshll.u32 [#allocation2], 4
          %s342 = int_to_ptr.vmem [resolvable:$true] %s341
          %344 = dma.hbm_to_vmem [thread:$0]  %s2, 32, %s342, [#allocation3]
        $region16: #{tpu_custom_call.1} parent=11 // pred_fallthru
          _
      $region12: #{tpu_custom_call.1} parent=5 // pred_fallthru
        _
      %p345 = scmp.lt.s32.totalorder %s26, 4
      // Predicated region
      $region17: #{tpu_custom_call.1} parent=5 // pred_check
        %p346 = pneg %p345
      $region18: #{tpu_custom_call.1} parent=5 // pred_check_branch
        %348 = sbr.rel (%p346) target = $region20
      $region19: #{tpu_custom_call.1} parent=5 // pred_region
        // Predicated region
        $region21: #{tpu_custom_call.1} parent=19 // pred_check
          %p349 = pneg %p58
        $region22: #{tpu_custom_call.1} parent=19 // pred_check_branch
          %351 = sbr.rel (%p349) target = $region24
        $region23: #{tpu_custom_call.1} parent=19 // pred_region
          %p352 = scmp.lt.s32.totalorder %s33, 1
          %s353 = scalar_select %p352, %s33, 1
          %s354 = smul.addr %s353, 8
          %s355 = scalar_lea.vmem %s0, %s354
        $region24: #{tpu_custom_call.1} parent=19 // pred_fallthru
          _
        // Predicated region
        $region25: #{tpu_custom_call.1} parent=19 // pred_check
          %p356 = pneg %p84
        $region26: #{tpu_custom_call.1} parent=19 // pred_check_branch
          %358 = sbr.rel (%p356) target = $region28
        $region27: #{tpu_custom_call.1} parent=19 // pred_region
          %p359 = scmp.lt.s32.totalorder %s33, 1
          %s360 = scalar_select %p359, %s33, 1
          %s361 = scalar_lea.vmem %s1, %s360
        $region28: #{tpu_custom_call.1} parent=19 // pred_fallthru
          _
        // Predicated region
        $region29: #{tpu_custom_call.1} parent=19 // pred_check
          %p362 = pneg %p131
        $region30: #{tpu_custom_call.1} parent=19 // pred_check_branch
          %364 = sbr.rel (%p362) target = $region32
        $region31: #{tpu_custom_call.1} parent=19 // pred_region
          %p365 = scmp.lt.s32.totalorder %s34, 1
          %s366 = scalar_select %p365, %s34, 1
          %s367 = smul.addr %s366, 8
          %s368 = scalar_lea.vmem %s3, %s367
        $region32: #{tpu_custom_call.1} parent=19 // pred_fallthru
          _
        // Predicated region
        $region33: #{tpu_custom_call.1} parent=19 // pred_check
          %p369 = pneg %p157
        $region34: #{tpu_custom_call.1} parent=19 // pred_check_branch
          %371 = sbr.rel (%p369) target = $region36
        $region35: #{tpu_custom_call.1} parent=19 // pred_region
          %s372 = sand.u32 %s26, 1
          %s373 = scalar_lea.sflag [#allocation6], %s372
          %s374 = sand.u32 %s147, 1
          %s375 = smul.addr %s374, 128
          %s376 = scalar_lea.vmem [#allocation5], %s375
          %s378 = ssub.s32 2048, 2048
          %379 = vsyncadd %s373, %s378
          %s380 = smul.addr %s34, 32
          %s381 = smul.addr %s380, 64
          %s382 = scalar_lea.hbm %s4, %s381
          %s383 = sshll.u32 %s376, 4
          %s384 = int_to_ptr.vmem [resolvable:$true] %s383
          %389 = dma.hbm_to_vmem [thread:$0]  %s382, 2048, %s384, %s373, 128, 128, 8
        $region36: #{tpu_custom_call.1} parent=19 // pred_fallthru
          _
        // Predicated region
        $region37: #{tpu_custom_call.1} parent=19 // pred_check
          %p390 = pneg %p183
        $region38: #{tpu_custom_call.1} parent=19 // pred_check_branch
          %392 = sbr.rel (%p390) target = $region40
        $region39: #{tpu_custom_call.1} parent=19 // pred_region
          %s393 = sand.u32 %s26, 1
          %s394 = scalar_lea.sflag [#allocation6], %s393
          %s395 = sand.u32 %s173, 1
          %s396 = smul.addr %s395, 2
          %s397 = scalar_lea.vmem [#allocation7], %s396
          %s399 = ssub.s32 32, 32
          %400 = vsyncadd %s394, %s399
          %s401 = smul.addr %s34, 2
          %s402 = smul.addr %s401, 16
          %s403 = scalar_lea.hbm %s5, %s402
          %s405 = sshll.u32 %s397, 4
          %s406 = int_to_ptr.vmem [resolvable:$true] %s405
          %408 = dma.hbm_to_vmem [thread:$0]  %s403, 32, %s406, %s394
        $region40: #{tpu_custom_call.1} parent=19 // pred_fallthru
          _
        // Predicated region
        $region41: #{tpu_custom_call.1} parent=19 // pred_check
          %p409 = pneg %p209
        $region42: #{tpu_custom_call.1} parent=19 // pred_check_branch
          %411 = sbr.rel (%p409) target = $region44
        $region43: #{tpu_custom_call.1} parent=19 // pred_region
          %p412 = scmp.lt.s32.totalorder %s34, 1
          %s413 = scalar_select %p412, %s34, 1
          %s414 = smul.addr %s413, 4
          %s415 = smul.addr %s414, 4
          %s416 = scalar_lea.vmem %s6, %s415
        $region44: #{tpu_custom_call.1} parent=19 // pred_fallthru
          _
        // Predicated region
        $region45: #{tpu_custom_call.1} parent=19 // pred_check
          %p417 = pneg %p235
        $region46: #{tpu_custom_call.1} parent=19 // pred_check_branch
          %419 = sbr.rel (%p417) target = $region48
        $region47: #{tpu_custom_call.1} parent=19 // pred_region
          %s420 = sand.u32 %s26, 1
          %s421 = scalar_lea.sflag [#allocation9], %s420
          %s422 = sand.u32 %s225, 1
          %s423 = smul.addr %s422, 128
          %s424 = scalar_lea.vmem [#allocation8], %s423
          %s426 = ssub.s32 2048, 2048
          %427 = vsyncadd %s421, %s426
          %s428 = smul.addr %s34, 32
          %s429 = smul.addr %s428, 64
          %s430 = scalar_lea.hbm %s7, %s429
          %s431 = sshll.u32 %s424, 4
          %s432 = int_to_ptr.vmem [resolvable:$true] %s431
          %437 = dma.hbm_to_vmem [thread:$0]  %s430, 2048, %s432, %s421, 128, 128, 8
        $region48: #{tpu_custom_call.1} parent=19 // pred_fallthru
          _
        // Predicated region
        $region49: #{tpu_custom_call.1} parent=19 // pred_check
          %p438 = pneg %p261
        $region50: #{tpu_custom_call.1} parent=19 // pred_check_branch
          %440 = sbr.rel (%p438) target = $region52
        $region51: #{tpu_custom_call.1} parent=19 // pred_region
          %p441 = scmp.lt.s32.totalorder %s34, 1
          %s442 = scalar_select %p441, %s34, 1
          %s443 = smul.addr %s442, 2
          %s444 = scalar_lea.vmem %s8, %s443
        $region52: #{tpu_custom_call.1} parent=19 // pred_fallthru
          _
        // Predicated region
        $region53: #{tpu_custom_call.1} parent=19 // pred_check
          %p445 = pneg %p287
        $region54: #{tpu_custom_call.1} parent=19 // pred_check_branch
          %447 = sbr.rel (%p445) target = $region56
        $region55: #{tpu_custom_call.1} parent=19 // pred_region
          %s448 = sand.u32 %s26, 1
          %s449 = scalar_lea.sflag [#allocation9], %s448
          %s450 = sand.u32 %s277, 1
          %s451 = smul.addr %s450, 128
          %s452 = scalar_lea.vmem [#allocation10], %s451
          %s454 = ssub.s32 2048, 2048
          %455 = vsyncadd %s449, %s454
          %s456 = smul.addr %s34, 32
          %s457 = smul.addr %s456, 64
          %s458 = scalar_lea.hbm %s9, %s457
          %s459 = sshll.u32 %s452, 4
          %s460 = int_to_ptr.vmem [resolvable:$true] %s459
          %465 = dma.hbm_to_vmem [thread:$0]  %s458, 2048, %s460, %s449, 64, 64, 4
        $region56: #{tpu_custom_call.1} parent=19 // pred_fallthru
          _
      $region20: #{tpu_custom_call.1} parent=5 // pred_fallthru
        _
      %p466 = scmp.le.s32.totalorder 1, %s26
      %p467 = scmp.lt.s32.totalorder %s26, 5
      %p468 = pnand %p466, %p467
      %p469 = pneg %p468
      // Predicated region
      $region57: #{tpu_custom_call.1} parent=5 // pred_check
        _
      $region58: #{tpu_custom_call.1} parent=5 // pred_check_branch
        %471 = sbr.rel (%p468) target = $region60
      $region59: #{tpu_custom_call.1} parent=5 // pred_region
        %s472 = ssub.s32 %s26, 1
        // Predicated region
        $region61: #{tpu_custom_call.1} parent=59 // pred_check
          %p473 = pneg %p111
        $region62: #{tpu_custom_call.1} parent=59 // pred_check_branch
          %475 = sbr.rel (%p473) target = $region64
        $region63: #{tpu_custom_call.1} parent=59 // pred_region
          %476 = dma.done [#allocation3], 32
        $region64: #{tpu_custom_call.1} parent=59 // pred_fallthru
          _
        %s477 = sand.u32 %s31, 1
        %s478 = scalar_lea.sflag [#allocation6], %s477
        %s479 = sand.u32 %s150, 1
        %s480 = smul.addr %s479, 128
        %s481 = scalar_lea.vmem [#allocation5], %s480
        // Predicated region
        $region65: #{tpu_custom_call.1} parent=59 // pred_check
          %p482 = pneg %p163
        $region66: #{tpu_custom_call.1} parent=59 // pred_check_branch
          %484 = sbr.rel (%p482) target = $region68
        $region67: #{tpu_custom_call.1} parent=59 // pred_region
          %485 = dma.done %s478, 2048
        $region68: #{tpu_custom_call.1} parent=59 // pred_fallthru
          _
        %s486 = sand.u32 %s31, 1
        %s487 = scalar_lea.sflag [#allocation6], %s486
        %s488 = sand.u32 %s176, 1
        %s489 = smul.addr %s488, 2
        %s490 = scalar_lea.vmem [#allocation7], %s489
        // Predicated region
        $region69: #{tpu_custom_call.1} parent=59 // pred_check
          %p491 = pneg %p189
        $region70: #{tpu_custom_call.1} parent=59 // pred_check_branch
          %493 = sbr.rel (%p491) target = $region72
        $region71: #{tpu_custom_call.1} parent=59 // pred_region
          %494 = dma.done %s487, 32
        $region72: #{tpu_custom_call.1} parent=59 // pred_fallthru
          _
        %s495 = sand.u32 %s31, 1
        %s496 = scalar_lea.sflag [#allocation9], %s495
        %s497 = sand.u32 %s228, 1
        %s498 = smul.addr %s497, 128
        %s499 = scalar_lea.vmem [#allocation8], %s498
        // Predicated region
        $region73: #{tpu_custom_call.1} parent=59 // pred_check
          %p500 = pneg %p241
        $region74: #{tpu_custom_call.1} parent=59 // pred_check_branch
          %502 = sbr.rel (%p500) target = $region76
        $region75: #{tpu_custom_call.1} parent=59 // pred_region
          %503 = dma.done %s496, 2048
        $region76: #{tpu_custom_call.1} parent=59 // pred_fallthru
          _
        %s504 = sand.u32 %s31, 1
        %s505 = scalar_lea.sflag [#allocation9], %s504
        %s506 = sand.u32 %s280, 1
        %s507 = smul.addr %s506, 128
        %s508 = scalar_lea.vmem [#allocation10], %s507
        // Predicated region
        $region77: #{tpu_custom_call.1} parent=59 // pred_check
          %p509 = pneg %p293
        $region78: #{tpu_custom_call.1} parent=59 // pred_check_branch
          %511 = sbr.rel (%p509) target = $region80
        $region79: #{tpu_custom_call.1} parent=59 // pred_region
          %512 = dma.done %s505, 2048
        $region80: #{tpu_custom_call.1} parent=59 // pred_fallthru
          _
        %p513 = scmp.lt.s32.totalorder %s35, 1
        %s514 = scalar_select %p513, %s35, 1
        %s515 = smul.addr %s514, 8
        %s516 = scalar_lea.vmem %s0, %s515
        %p517 = pneg %p64
        %p518 = pneg %p61
        %p519 = scmp.lt.s32.totalorder %s35, 1
        %s520 = scalar_select %p519, %s35, 1
        %s521 = scalar_lea.vmem %s1, %s520
        %p522 = pneg %p90
        %p523 = pneg %p87
        %p524 = pneg %p111
        %p525 = pneg %p108
        %p526 = scmp.lt.s32.totalorder %s36, 1
        %s527 = scalar_select %p526, %s36, 1
        %s528 = smul.addr %s527, 8
        %s529 = scalar_lea.vmem %s3, %s528
        %p530 = pneg %p137
        %p531 = pneg %p134
        %s532 = sand.u32 %s31, 1
        %s533 = scalar_lea.sflag [#allocation6], %s532
        %s534 = sand.u32 %s150, 1
        %s535 = smul.addr %s534, 128
        %s536 = scalar_lea.vmem [#allocation5], %s535
        %p537 = pneg %p163
        %p538 = pneg %p160
        %s539 = sand.u32 %s31, 1
        %s540 = scalar_lea.sflag [#allocation6], %s539
        %s541 = sand.u32 %s176, 1
        %s542 = smul.addr %s541, 2
        %s543 = scalar_lea.vmem [#allocation7], %s542
        %p544 = pneg %p189
        %p545 = pneg %p186
        %p546 = scmp.lt.s32.totalorder %s36, 1
        %s547 = scalar_select %p546, %s36, 1
        %s548 = smul.addr %s547, 4
        %s549 = smul.addr %s548, 4
        %s550 = scalar_lea.vmem %s6, %s549
        %p551 = pneg %p215
        %p552 = pneg %p212
        %s553 = sand.u32 %s31, 1
        %s554 = scalar_lea.sflag [#allocation9], %s553
        %s555 = sand.u32 %s228, 1
        %s556 = smul.addr %s555, 128
        %s557 = scalar_lea.vmem [#allocation8], %s556
        %p558 = pneg %p241
        %p559 = pneg %p238
        %p560 = scmp.lt.s32.totalorder %s36, 1
        %s561 = scalar_select %p560, %s36, 1
        %s562 = smul.addr %s561, 2
        %s563 = scalar_lea.vmem %s8, %s562
        %p564 = pneg %p267
        %p565 = pneg %p264
        %s566 = sand.u32 %s31, 1
        %s567 = scalar_lea.sflag [#allocation9], %s566
        %s568 = sand.u32 %s280, 1
        %s569 = smul.addr %s568, 128
        %s570 = scalar_lea.vmem [#allocation10], %s569
        %p571 = pneg %p293
        %p572 = pneg %p290
        %p573 = pneg %p319
        %p574 = pneg %p316
        %s575 = sand.u32 %s306, 1
        %s576 = scalar_lea.sflag [#allocation4], %s575
        %s577 = sand.u32 %s306, 1
        %s578 = smul.addr %s577, 8
        %s579 = scalar_lea.vmem [#allocation11], %s578
        %p580 = scmp.lt.s32.totalorder %s35, 1
        %s581 = scalar_select %p580, %s35, 1
        %s582 = smul.addr %s581, 8
        %s583 = scalar_lea.vmem %s0, %s582
        %p584 = scmp.lt.s32.totalorder %s35, 1
        %s585 = scalar_select %p584, %s35, 1
        %s586 = scalar_lea.vmem %s1, %s585
        %p587 = scmp.lt.s32.totalorder %s36, 1
        %s588 = scalar_select %p587, %s36, 1
        %s589 = smul.addr %s588, 8
        %s590 = scalar_lea.vmem %s3, %s589
        %p591 = scmp.lt.s32.totalorder %s36, 1
        %s592 = scalar_select %p591, %s36, 1
        %s593 = smul.addr %s592, 4
        %s594 = smul.addr %s593, 4
        %s595 = scalar_lea.vmem %s6, %s594
        %p596 = scmp.lt.s32.totalorder %s36, 1
        %s597 = scalar_select %p596, %s36, 1
        %s598 = smul.addr %s597, 2
        %s599 = scalar_lea.vmem %s8, %s598
        %p601 = scmp.eq.s32.totalorder %s36, 0
        // Predicated region
        $region81: #{tpu_custom_call.1} parent=59 // pred_check
          %p602 = pneg %p601
        $region82: #{tpu_custom_call.1} parent=59 // pred_check_branch
          %604 = sbr.rel (%p602) target = $region84
        $region83: #{tpu_custom_call.1} parent=59 // pred_region
          %v605 = vld [vmem:[%s583] sm:$0xff]
          %606 = vst [vmem:[%s579] sm:$0xff] %v605
        $region84: #{tpu_custom_call.1} parent=59 // pred_fallthru
          _
        %v607 = vld [vmem:[%s579] sm:$0xff]
        %v608 = vlaneseq
        %v609 = vand.u32 %v608, 127
        %vm610 = vcmp.lt.s32.totalorder %v609, 32
        %v611 = vsel %vm610, 1, 0
        %v612 = vcvt.s32.f32 %v611
        %v613 = vld [vmem:[%s590] sm:$0x3f]
        %v614 = vld [vmem:[%s586] sm:$0x1]
        %615 = vadd.xlane.f32.xlu0 %v607
        %v616 = vpop.xlane.xlu0 %615
        %v617 = vmul.f32 %v616, 0.03125
        %v618 = vsub.f32 %v607, %v617
        %v619 = vmul.f32 %v618, %v612
        %v620 = vmul.f32 %v619, %v619
        %621 = vadd.xlane.f32.xlu0 %v620
        %v622 = vpop.xlane.xlu0 %621
        %v623 = vmul.f32 %v622, 0.03125
        %v624 = vadd.f32 %v623, 1e-05
        %v625 = vrsqrt.pop %v624
        %v626 = vmul.f32 %v619, %v625
        %v627 = vlaneseq
        %v628 = vshrl.u32 %v627, 7
        %v629 = vsub.s32 0, %v628
        %v630 = vrot.slane %v613, %v629
        %v631 = vmul.f32 %v626, %v630
        %v632 = vlaneseq
        %v633 = vshrl.u32 %v632, 7
        %v634 = vsub.s32 1, %v633
        %v635 = vrot.slane %v613, %v634
        %v636 = vadd.f32 %v631, %v635
        %v637 = vpack.c.bf16 %v636, %v636
        %v638 = vld [vmem:[%s481] sm:$0xff]
        %v639 = vld [vmem:[%s481 + $0x8] sm:$0xff]
        %v640 = vld [vmem:[%s481 + $0x10] sm:$0xff]
        %v641 = vld [vmem:[%s481 + $0x18] sm:$0xff]
        %v642 = vld [vmem:[%s481 + $0x20] sm:$0xff]
        %v643 = vld [vmem:[%s481 + $0x28] sm:$0xff]
        %v644 = vld [vmem:[%s481 + $0x30] sm:$0xff]
        %v645 = vld [vmem:[%s481 + $0x38] sm:$0xff]
        %v646 = vld [vmem:[%s481 + $0x40] sm:$0xff]
        %v647 = vld [vmem:[%s481 + $0x48] sm:$0xff]
        %v648 = vld [vmem:[%s481 + $0x50] sm:$0xff]
        %v649 = vld [vmem:[%s481 + $0x58] sm:$0xff]
        %v650 = vld [vmem:[%s481 + $0x60] sm:$0xff]
        %v651 = vld [vmem:[%s481 + $0x68] sm:$0xff]
        %v652 = vld [vmem:[%s481 + $0x70] sm:$0xff]
        %v653 = vld [vmem:[%s481 + $0x78] sm:$0xff]
        %v654 = vld [vmem:[%s490] sm:$0x3]
        %v656 = vlaneseq
        %v657 = vshrl.u32 %v656, 7
        %v658 = vsub.s32 0, %v657
        %v659 = vrot.slane %v654, %v658
        %v677 = vunpack.c.l.b16 %v638
        %v678 = vunpack.c.h.b16 %v638
        %v679 = vunpack.c.l.b16 %v639
        %v680 = vunpack.c.h.b16 %v639
        %v681 = vunpack.c.l.b16 %v640
        %v682 = vunpack.c.h.b16 %v640
        %v683 = vunpack.c.l.b16 %v641
        %v684 = vunpack.c.h.b16 %v641
        %v685 = vunpack.c.l.b16 %v642
        %v686 = vunpack.c.h.b16 %v642
        %v687 = vunpack.c.l.b16 %v643
        %v688 = vunpack.c.h.b16 %v643
        %v689 = vunpack.c.l.b16 %v644
        %v690 = vunpack.c.h.b16 %v644
        %v691 = vunpack.c.l.b16 %v645
        %v692 = vunpack.c.h.b16 %v645
        %v693 = vunpack.c.l.b16 %v646
        %v694 = vunpack.c.h.b16 %v646
        %v695 = vunpack.c.l.b16 %v647
        %v696 = vunpack.c.h.b16 %v647
        %v697 = vunpack.c.l.b16 %v648
        %v698 = vunpack.c.h.b16 %v648
        %v699 = vunpack.c.l.b16 %v649
        %v700 = vunpack.c.h.b16 %v649
        %v701 = vunpack.c.l.b16 %v650
        %v702 = vunpack.c.h.b16 %v650
        %v703 = vunpack.c.l.b16 %v651
        %v704 = vunpack.c.h.b16 %v651
        %v705 = vunpack.c.l.b16 %v652
        %v706 = vunpack.c.h.b16 %v652
        %v707 = vunpack.c.l.b16 %v653
        %v708 = vunpack.c.h.b16 %v653
        %v709 = vpack.c.b16 %v679, %v677
        %v710 = vpack.c.b16 %v680, %v678
        %v711 = vpack.c.b16 %v683, %v681
        %v712 = vpack.c.b16 %v684, %v682
        %v713 = vpack.c.b16 %v687, %v685
        %v714 = vpack.c.b16 %v688, %v686
        %v715 = vpack.c.b16 %v691, %v689
        %v716 = vpack.c.b16 %v692, %v690
        %v717 = vpack.c.b16 %v695, %v693
        %v718 = vpack.c.b16 %v696, %v694
        %v719 = vpack.c.b16 %v699, %v697
        %v720 = vpack.c.b16 %v700, %v698
        %v721 = vpack.c.b16 %v703, %v701
        %v722 = vpack.c.b16 %v704, %v702
        %v723 = vpack.c.b16 %v707, %v705
        %v724 = vpack.c.b16 %v708, %v706
        %741 = vmatprep.subr.bf16.mxu0 %v710
        %742 = vmatpush1.bf16.msra.mxu0 %v709
        %743 = vmatprep.subr.bf16.mxu0 %v712
        %744 = vmatpush1.bf16.msra.mxu0 %v711
        %745 = vmatprep.subr.bf16.mxu0 %v714
        %746 = vmatpush1.bf16.msra.mxu0 %v713
        %747 = vmatprep.subr.bf16.mxu0 %v716
        %748 = vmatpush1.bf16.msra.mxu0 %v715
        %749 = vmatprep.subr.bf16.mxu0 %v718
        %750 = vmatpush1.bf16.msra.mxu0 %v717
        %751 = vmatprep.subr.bf16.mxu0 %v720
        %752 = vmatpush1.bf16.msra.mxu0 %v719
        %753 = vmatprep.subr.bf16.mxu0 %v722
        %754 = vmatpush1.bf16.msra.mxu0 %v721
        %755 = vmatprep.subr.bf16.mxu0 %v724
        %756 = vmatpush1.bf16.msra.mxu0 %v723
        %757 = vmatprep.subr.bf16.mxu0 0
        %758 = vmatpush1.bf16.msra.mxu0 0
        %759 = vmatprep.subr.bf16.mxu0 0
        %760 = vmatpush1.bf16.msra.mxu0 0
        %761 = vmatprep.subr.bf16.mxu0 0
        %762 = vmatpush1.bf16.msra.mxu0 0
        %763 = vmatprep.subr.bf16.mxu0 0
        %764 = vmatpush1.bf16.msra.mxu0 0
        %765 = vmatprep.subr.bf16.mxu0 0
        %766 = vmatpush1.bf16.msra.mxu0 0
        %767 = vmatprep.subr.bf16.mxu0 0
        %768 = vmatpush1.bf16.msra.mxu0 0
        %769 = vmatprep.subr.bf16.mxu0 0
        %770 = vmatpush1.bf16.msra.mxu0 0
        %771 = vmatprep.subr.bf16.mxu0 0
        %772 = vmatpush1.bf16.msra.mxu0 0
        %773 = vmatprep.mubr.bf16.mxu0 0
        %774 = vmatmul.mubr.bf16.gmra.mrb[0].mxu0 %v637
        %v775 = vpop.f32.mrb[0].mxu0
        %v776 = vadd.f32 %v659, %v775
        %v777 = vpop.f32.mrb[0].mxu0
        %v778 = vpop.f32.mrb[0].mxu0
        %v779 = vpop.f32.mrb[0].mxu0
        %780 = vdwg.mxu0
        %v782 = vlaneseq
        %v783 = vshrl.u32 %v782, 7
        %v784 = vsub.s32 0, %v783
        %v785 = vrot.slane %v614, %v784
        %788 = vrot.lane.b32.xlu0 %v776, 96
        %v789 = vpop.permute.xlu0 %788
        %vm790 = vcmask 64512
        %v791 = vsel %vm790, %v776, 0
        %v793 = vsel %vm790, %v789, 0
        %795 = vmatprep.subr.mxu0 0.0
        %796 = vmatpush1.xpose.msra.mxu0 %v793
        %797 = vmatprep.subr.mxu0 0.0
        %798 = vmatpush1.xpose.msra.mxu0 0.0
        %799 = vmatprep.subr.mxu0 0.0
        %800 = vmatpush1.xpose.msra.mxu0 0.0
        %801 = vmatprep.subr.mxu0 0.0
        %802 = vmatpush1.xpose.msra.mxu0 0.0
        %803 = vmatprep.subr.mxu0 0.0
        %804 = vmatpush1.xpose.msra.mxu0 0.0
        %805 = vmatprep.subr.mxu0 0.0
        %806 = vmatpush1.xpose.msra.mxu0 0.0
        %807 = vmatprep.subr.mxu0 0.0
        %808 = vmatpush1.xpose.msra.mxu0 0.0
        %809 = vmatprep.subr.mxu0 0.0
        %810 = vmatpush1.xpose.msra.mxu0 0.0
        %811 = vmatprep.subr.mxu0 0.0
        %812 = vmatpush1.xpose.msra.mxu0 0.0
        %813 = vmatprep.subr.mxu0 0.0
        %814 = vmatpush1.xpose.msra.mxu0 0.0
        %815 = vmatprep.subr.mxu0 0.0
        %816 = vmatpush1.xpose.msra.mxu0 0.0
        %817 = vmatprep.subr.mxu0 0.0
        %818 = vmatpush1.xpose.msra.mxu0 0.0
        %819 = vmatprep.subr.mxu0 0.0
        %820 = vmatpush1.xpose.msra.mxu0 0.0
        %821 = vmatprep.subr.mxu0 0.0
        %822 = vmatpush1.xpose.msra.mxu0 0.0
        %823 = vmatprep.subr.mxu0 0.0
        %824 = vmatpush1.xpose.msra.mxu0 0.0
        %825 = vmatprep.subr.mxu0 0.0
        %826 = vmatpush1.xpose.msra.mxu0 0.0
        %827 = vmatprep.subr.mxu0 0.0
        %828 = vmatpush1.xpose.msra.mxu0 0.0
        %829 = vmatprep.subr.mxu0 0.0
        %830 = vmatpush1.xpose.msra.mxu0 0.0
        %831 = vmatprep.subr.mxu0 0.0
        %832 = vmatpush1.xpose.msra.mxu0 0.0
        %833 = vmatprep.subr.mxu0 0.0
        %834 = vmatpush1.xpose.msra.mxu0 0.0
        %835 = vmatprep.subr.mxu0 0.0
        %836 = vmatpush1.xpose.msra.mxu0 0.0
        %837 = vmatprep.subr.mxu0 0.0
        %838 = vmatpush1.xpose.msra.mxu0 0.0
        %839 = vmatprep.subr.mxu0 0.0
        %840 = vmatpush1.xpose.msra.mxu0 0.0
        %841 = vmatprep.subr.mxu0 0.0
        %842 = vmatpush1.xpose.msra.mxu0 0.0
        %843 = vmatprep.subr.mxu0 0.0
        %844 = vmatpush1.xpose.msra.mxu0 0.0
        %845 = vmatprep.subr.mxu0 0.0
        %846 = vmatpush1.xpose.msra.mxu0 0.0
        %847 = vmatprep.subr.mxu0 0.0
        %848 = vmatpush1.xpose.msra.mxu0 0.0
        %849 = vmatprep.subr.mxu0 0.0
        %850 = vmatpush1.xpose.msra.mxu0 0.0
        %851 = vmatprep.subr.mxu0 0.0
        %852 = vmatpush1.xpose.msra.mxu0 0.0
        %853 = vmatprep.subr.mxu0 0.0
        %854 = vmatpush1.xpose.msra.mxu0 0.0
        %855 = vmatprep.subr.mxu0 0.0
        %856 = vmatpush1.xpose.msra.mxu0 0.0
        %857 = vmatprep.subr.mxu0 0.0
        %858 = vmatpush1.xpose.msra.mxu0 0.0
        %859 = vmatprep.mubr.f32.mxu0 0.0
        %860 = vmatmul.mubr.f32.gmra.mrb[0].mxu0 %v791
        %v861 = vpop.f32.mrb[0].mxu0
        %v862 = vadd.f32 %v785, %v861
        %v863 = vpop.f32.mrb[0].mxu0
        %864 = vdwg.mxu0
        %v865 = vsel %vm790, %v862, -inf
        %866 = vmax.xlane.f32.xlu0 %v865
        %v867 = vpop.xlane.xlu0 %866
        %v868 = vsub.f32 %v862, %v867
        %v869 = vmul.f32 %v868, 1.442695
        %v870 = vpow.pop %v869
        %v871 = vsel %vm790, %v870, 0.0
        %872 = vadd.xlane.f32.xlu0 %v871
        %v873 = vpop.xlane.xlu0 %872
        %v874 = vrcp.pop %v873
        %v875 = vmul.f32 %v870, %v874
        %876 = vrot.lane.b32.xlu0 %v776, 64
        %v877 = vpop.permute.xlu0 %876
        %v880 = vsel %vm790, %v875, 0
        %882 = vmatprep.subr.mxu0 0.0
        %883 = vmatpush1.msra.mxu0 %v877
        %884 = vmatprep.subr.mxu0 0.0
        %885 = vmatpush1.msra.mxu0 0.0
        %886 = vmatprep.subr.mxu0 0.0
        %887 = vmatpush1.msra.mxu0 0.0
        %888 = vmatprep.subr.mxu0 0.0
        %889 = vmatpush1.msra.mxu0 0.0
        %890 = vmatprep.subr.mxu0 0.0
        %891 = vmatpush1.msra.mxu0 0.0
        %892 = vmatprep.subr.mxu0 0.0
        %893 = vmatpush1.msra.mxu0 0.0
        %894 = vmatprep.subr.mxu0 0.0
        %895 = vmatpush1.msra.mxu0 0.0
        %896 = vmatprep.subr.mxu0 0.0
        %897 = vmatpush1.msra.mxu0 0.0
        %898 = vmatprep.subr.mxu0 0.0
        %899 = vmatpush1.msra.mxu0 0.0
        %900 = vmatprep.subr.mxu0 0.0
        %901 = vmatpush1.msra.mxu0 0.0
        %902 = vmatprep.subr.mxu0 0.0
        %903 = vmatpush1.msra.mxu0 0.0
        %904 = vmatprep.subr.mxu0 0.0
        %905 = vmatpush1.msra.mxu0 0.0
        %906 = vmatprep.subr.mxu0 0.0
        %907 = vmatpush1.msra.mxu0 0.0
        %908 = vmatprep.subr.mxu0 0.0
        %909 = vmatpush1.msra.mxu0 0.0
        %910 = vmatprep.subr.mxu0 0.0
        %911 = vmatpush1.msra.mxu0 0.0
        %912 = vmatprep.subr.mxu0 0.0
        %913 = vmatpush1.msra.mxu0 0.0
        %914 = vmatprep.subr.mxu0 0.0
        %915 = vmatpush1.msra.mxu0 0.0
        %916 = vmatprep.subr.mxu0 0.0
        %917 = vmatpush1.msra.mxu0 0.0
        %918 = vmatprep.subr.mxu0 0.0
        %919 = vmatpush1.msra.mxu0 0.0
        %920 = vmatprep.subr.mxu0 0.0
        %921 = vmatpush1.msra.mxu0 0.0
        %922 = vmatprep.subr.mxu0 0.0
        %923 = vmatpush1.msra.mxu0 0.0
        %924 = vmatprep.subr.mxu0 0.0
        %925 = vmatpush1.msra.mxu0 0.0
        %926 = vmatprep.subr.mxu0 0.0
        %927 = vmatpush1.msra.mxu0 0.0
        %928 = vmatprep.subr.mxu0 0.0
        %929 = vmatpush1.msra.mxu0 0.0
        %930 = vmatprep.subr.mxu0 0.0
        %931 = vmatpush1.msra.mxu0 0.0
        %932 = vmatprep.subr.mxu0 0.0
        %933 = vmatpush1.msra.mxu0 0.0
        %934 = vmatprep.subr.mxu0 0.0
        %935 = vmatpush1.msra.mxu0 0.0
        %936 = vmatprep.subr.mxu0 0.0
        %937 = vmatpush1.msra.mxu0 0.0
        %938 = vmatprep.subr.mxu0 0.0
        %939 = vmatpush1.msra.mxu0 0.0
        %940 = vmatprep.subr.mxu0 0.0
        %941 = vmatpush1.msra.mxu0 0.0
        %942 = vmatprep.subr.mxu0 0.0
        %943 = vmatpush1.msra.mxu0 0.0
        %944 = vmatprep.subr.mxu0 0.0
        %945 = vmatpush1.msra.mxu0 0.0
        %946 = vmatprep.mubr.f32.mxu0 0.0
        %947 = vmatmul.mubr.f32.gmra.mrb[0].mxu0 %v880
        %v948 = vpop.f32.mrb[0].mxu0
        %v949 = vadd.f32 0.0, %v948
        %v950 = vpop.f32.mrb[0].mxu0
        %951 = vdwg.mxu0
        %952 = vrot.lane.b32.xlu0 %v776, 120
        %v953 = vpop.permute.xlu0 %952
        %954 = vrot.lane.b32.xlu0 %v776, 88
        %v955 = vpop.permute.xlu0 %954
        %v956 = vsel %vm790, %v953, 0
        %v958 = vsel %vm790, %v955, 0
        %960 = vmatprep.subr.mxu0 0.0
        %961 = vmatpush1.xpose.msra.mxu0 %v958
        %962 = vmatprep.subr.mxu0 0.0
        %963 = vmatpush1.xpose.msra.mxu0 0.0
        %964 = vmatprep.subr.mxu0 0.0
        %965 = vmatpush1.xpose.msra.mxu0 0.0
        %966 = vmatprep.subr.mxu0 0.0
        %967 = vmatpush1.xpose.msra.mxu0 0.0
        %968 = vmatprep.subr.mxu0 0.0
        %969 = vmatpush1.xpose.msra.mxu0 0.0
        %970 = vmatprep.subr.mxu0 0.0
        %971 = vmatpush1.xpose.msra.mxu0 0.0
        %972 = vmatprep.subr.mxu0 0.0
        %973 = vmatpush1.xpose.msra.mxu0 0.0
        %974 = vmatprep.subr.mxu0 0.0
        %975 = vmatpush1.xpose.msra.mxu0 0.0
        %976 = vmatprep.subr.mxu0 0.0
        %977 = vmatpush1.xpose.msra.mxu0 0.0
        %978 = vmatprep.subr.mxu0 0.0
        %979 = vmatpush1.xpose.msra.mxu0 0.0
        %980 = vmatprep.subr.mxu0 0.0
        %981 = vmatpush1.xpose.msra.mxu0 0.0
        %982 = vmatprep.subr.mxu0 0.0
        %983 = vmatpush1.xpose.msra.mxu0 0.0
        %984 = vmatprep.subr.mxu0 0.0
        %985 = vmatpush1.xpose.msra.mxu0 0.0
        %986 = vmatprep.subr.mxu0 0.0
        %987 = vmatpush1.xpose.msra.mxu0 0.0
        %988 = vmatprep.subr.mxu0 0.0
        %989 = vmatpush1.xpose.msra.mxu0 0.0
        %990 = vmatprep.subr.mxu0 0.0
        %991 = vmatpush1.xpose.msra.mxu0 0.0
        %992 = vmatprep.subr.mxu0 0.0
        %993 = vmatpush1.xpose.msra.mxu0 0.0
        %994 = vmatprep.subr.mxu0 0.0
        %995 = vmatpush1.xpose.msra.mxu0 0.0
        %996 = vmatprep.subr.mxu0 0.0
        %997 = vmatpush1.xpose.msra.mxu0 0.0
        %998 = vmatprep.subr.mxu0 0.0
        %999 = vmatpush1.xpose.msra.mxu0 0.0
        %1000 = vmatprep.subr.mxu0 0.0
        %1001 = vmatpush1.xpose.msra.mxu0 0.0
        %1002 = vmatprep.subr.mxu0 0.0
        %1003 = vmatpush1.xpose.msra.mxu0 0.0
        %1004 = vmatprep.subr.mxu0 0.0
        %1005 = vmatpush1.xpose.msra.mxu0 0.0
        %1006 = vmatprep.subr.mxu0 0.0
        %1007 = vmatpush1.xpose.msra.mxu0 0.0
        %1008 = vmatprep.subr.mxu0 0.0
        %1009 = vmatpush1.xpose.msra.mxu0 0.0
        %1010 = vmatprep.subr.mxu0 0.0
        %1011 = vmatpush1.xpose.msra.mxu0 0.0
        %1012 = vmatprep.subr.mxu0 0.0
        %1013 = vmatpush1.xpose.msra.mxu0 0.0
        %1014 = vmatprep.subr.mxu0 0.0
        %1015 = vmatpush1.xpose.msra.mxu0 0.0
        %1016 = vmatprep.subr.mxu0 0.0
        %1017 = vmatpush1.xpose.msra.mxu0 0.0
        %1018 = vmatprep.subr.mxu0 0.0
        %1019 = vmatpush1.xpose.msra.mxu0 0.0
        %1020 = vmatprep.subr.mxu0 0.0
        %1021 = vmatpush1.xpose.msra.mxu0 0.0
        %1022 = vmatprep.subr.mxu0 0.0
        %1023 = vmatpush1.xpose.msra.mxu0 0.0
        %1024 = vmatprep.mubr.f32.mxu0 0.0
        %1025 = vmatmul.mubr.f32.gmra.mrb[0].mxu0 %v956
        %v1026 = vpop.f32.mrb[0].mxu0
        %v1027 = vadd.f32 %v785, %v1026
        %v1028 = vpop.f32.mrb[0].mxu0
        %1029 = vdwg.mxu0
        %v1030 = vsel %vm790, %v1027, -inf
        %1031 = vmax.xlane.f32.xlu0 %v1030
        %v1032 = vpop.xlane.xlu0 %1031
        %v1033 = vsub.f32 %v1027, %v1032
        %v1034 = vmul.f32 %v1033, 1.442695
        %v1035 = vpow.pop %v1034
        %v1036 = vsel %vm790, %v1035, 0.0
        %1037 = vadd.xlane.f32.xlu0 %v1036
        %v1038 = vpop.xlane.xlu0 %1037
        %v1039 = vrcp.pop %v1038
        %v1040 = vmul.f32 %v1035, %v1039
        %1041 = vrot.lane.b32.xlu0 %v776, 56
        %v1042 = vpop.permute.xlu0 %1041
        %v1045 = vsel %vm790, %v1040, 0
        %1047 = vmatprep.subr.mxu0 0.0
        %1048 = vmatpush1.msra.mxu0 %v1042
        %1049 = vmatprep.subr.mxu0 0.0
        %1050 = vmatpush1.msra.mxu0 0.0
        %1051 = vmatprep.subr.mxu0 0.0
        %1052 = vmatpush1.msra.mxu0 0.0
        %1053 = vmatprep.subr.mxu0 0.0
        %1054 = vmatpush1.msra.mxu0 0.0
        %1055 = vmatprep.subr.mxu0 0.0
        %1056 = vmatpush1.msra.mxu0 0.0
        %1057 = vmatprep.subr.mxu0 0.0
        %1058 = vmatpush1.msra.mxu0 0.0
        %1059 = vmatprep.subr.mxu0 0.0
        %1060 = vmatpush1.msra.mxu0 0.0
        %1061 = vmatprep.subr.mxu0 0.0
        %1062 = vmatpush1.msra.mxu0 0.0
        %1063 = vmatprep.subr.mxu0 0.0
        %1064 = vmatpush1.msra.mxu0 0.0
        %1065 = vmatprep.subr.mxu0 0.0
        %1066 = vmatpush1.msra.mxu0 0.0
        %1067 = vmatprep.subr.mxu0 0.0
        %1068 = vmatpush1.msra.mxu0 0.0
        %1069 = vmatprep.subr.mxu0 0.0
        %1070 = vmatpush1.msra.mxu0 0.0
        %1071 = vmatprep.subr.mxu0 0.0
        %1072 = vmatpush1.msra.mxu0 0.0
        %1073 = vmatprep.subr.mxu0 0.0
        %1074 = vmatpush1.msra.mxu0 0.0
        %1075 = vmatprep.subr.mxu0 0.0
        %1076 = vmatpush1.msra.mxu0 0.0
        %1077 = vmatprep.subr.mxu0 0.0
        %1078 = vmatpush1.msra.mxu0 0.0
        %1079 = vmatprep.subr.mxu0 0.0
        %1080 = vmatpush1.msra.mxu0 0.0
        %1081 = vmatprep.subr.mxu0 0.0
        %1082 = vmatpush1.msra.mxu0 0.0
        %1083 = vmatprep.subr.mxu0 0.0
        %1084 = vmatpush1.msra.mxu0 0.0
        %1085 = vmatprep.subr.mxu0 0.0
        %1086 = vmatpush1.msra.mxu0 0.0
        %1087 = vmatprep.subr.mxu0 0.0
        %1088 = vmatpush1.msra.mxu0 0.0
        %1089 = vmatprep.subr.mxu0 0.0
        %1090 = vmatpush1.msra.mxu0 0.0
        %1091 = vmatprep.subr.mxu0 0.0
        %1092 = vmatpush1.msra.mxu0 0.0
        %1093 = vmatprep.subr.mxu0 0.0
        %1094 = vmatpush1.msra.mxu0 0.0
        %1095 = vmatprep.subr.mxu0 0.0
        %1096 = vmatpush1.msra.mxu0 0.0
        %1097 = vmatprep.subr.mxu0 0.0
        %1098 = vmatpush1.msra.mxu0 0.0
        %1099 = vmatprep.subr.mxu0 0.0
        %1100 = vmatpush1.msra.mxu0 0.0
        %1101 = vmatprep.subr.mxu0 0.0
        %1102 = vmatpush1.msra.mxu0 0.0
        %1103 = vmatprep.subr.mxu0 0.0
        %1104 = vmatpush1.msra.mxu0 0.0
        %1105 = vmatprep.subr.mxu0 0.0
        %1106 = vmatpush1.msra.mxu0 0.0
        %1107 = vmatprep.subr.mxu0 0.0
        %1108 = vmatpush1.msra.mxu0 0.0
        %1109 = vmatprep.subr.mxu0 0.0
        %1110 = vmatpush1.msra.mxu0 0.0
        %1111 = vmatprep.mubr.f32.mxu0 0.0
        %1112 = vmatmul.mubr.f32.gmra.mrb[0].mxu0 %v1045
        %v1113 = vpop.f32.mrb[0].mxu0
        %v1114 = vadd.f32 0.0, %v1113
        %v1115 = vpop.f32.mrb[0].mxu0
        %1116 = vdwg.mxu0
        %1117 = vrot.lane.b32.xlu0 %v776, 112
        %v1118 = vpop.permute.xlu0 %1117
        %1119 = vrot.lane.b32.xlu0 %v776, 80
        %v1120 = vpop.permute.xlu0 %1119
        %v1121 = vsel %vm790, %v1118, 0
        %v1123 = vsel %vm790, %v1120, 0
        %1125 = vmatprep.subr.mxu0 0.0
        %1126 = vmatpush1.xpose.msra.mxu0 %v1123
        %1127 = vmatprep.subr.mxu0 0.0
        %1128 = vmatpush1.xpose.msra.mxu0 0.0
        %1129 = vmatprep.subr.mxu0 0.0
        %1130 = vmatpush1.xpose.msra.mxu0 0.0
        %1131 = vmatprep.subr.mxu0 0.0
        %1132 = vmatpush1.xpose.msra.mxu0 0.0
        %1133 = vmatprep.subr.mxu0 0.0
        %1134 = vmatpush1.xpose.msra.mxu0 0.0
        %1135 = vmatprep.subr.mxu0 0.0
        %1136 = vmatpush1.xpose.msra.mxu0 0.0
        %1137 = vmatprep.subr.mxu0 0.0
        %1138 = vmatpush1.xpose.msra.mxu0 0.0
        %1139 = vmatprep.subr.mxu0 0.0
        %1140 = vmatpush1.xpose.msra.mxu0 0.0
        %1141 = vmatprep.subr.mxu0 0.0
        %1142 = vmatpush1.xpose.msra.mxu0 0.0
        %1143 = vmatprep.subr.mxu0 0.0
        %1144 = vmatpush1.xpose.msra.mxu0 0.0
        %1145 = vmatprep.subr.mxu0 0.0
        %1146 = vmatpush1.xpose.msra.mxu0 0.0
        %1147 = vmatprep.subr.mxu0 0.0
        %1148 = vmatpush1.xpose.msra.mxu0 0.0
        %1149 = vmatprep.subr.mxu0 0.0
        %1150 = vmatpush1.xpose.msra.mxu0 0.0
        %1151 = vmatprep.subr.mxu0 0.0
        %1152 = vmatpush1.xpose.msra.mxu0 0.0
        %1153 = vmatprep.subr.mxu0 0.0
        %1154 = vmatpush1.xpose.msra.mxu0 0.0
        %1155 = vmatprep.subr.mxu0 0.0
        %1156 = vmatpush1.xpose.msra.mxu0 0.0
        %1157 = vmatprep.subr.mxu0 0.0
        %1158 = vmatpush1.xpose.msra.mxu0 0.0
        %1159 = vmatprep.subr.mxu0 0.0
        %1160 = vmatpush1.xpose.msra.mxu0 0.0
        %1161 = vmatprep.subr.mxu0 0.0
        %1162 = vmatpush1.xpose.msra.mxu0 0.0
        %1163 = vmatprep.subr.mxu0 0.0
        %1164 = vmatpush1.xpose.msra.mxu0 0.0
        %1165 = vmatprep.subr.mxu0 0.0
        %1166 = vmatpush1.xpose.msra.mxu0 0.0
        %1167 = vmatprep.subr.mxu0 0.0
        %1168 = vmatpush1.xpose.msra.mxu0 0.0
        %1169 = vmatprep.subr.mxu0 0.0
        %1170 = vmatpush1.xpose.msra.mxu0 0.0
        %1171 = vmatprep.subr.mxu0 0.0
        %1172 = vmatpush1.xpose.msra.mxu0 0.0
        %1173 = vmatprep.subr.mxu0 0.0
        %1174 = vmatpush1.xpose.msra.mxu0 0.0
        %1175 = vmatprep.subr.mxu0 0.0
        %1176 = vmatpush1.xpose.msra.mxu0 0.0
        %1177 = vmatprep.subr.mxu0 0.0
        %1178 = vmatpush1.xpose.msra.mxu0 0.0
        %1179 = vmatprep.subr.mxu0 0.0
        %1180 = vmatpush1.xpose.msra.mxu0 0.0
        %1181 = vmatprep.subr.mxu0 0.0
        %1182 = vmatpush1.xpose.msra.mxu0 0.0
        %1183 = vmatprep.subr.mxu0 0.0
        %1184 = vmatpush1.xpose.msra.mxu0 0.0
        %1185 = vmatprep.subr.mxu0 0.0
        %1186 = vmatpush1.xpose.msra.mxu0 0.0
        %1187 = vmatprep.subr.mxu0 0.0
        %1188 = vmatpush1.xpose.msra.mxu0 0.0
        %1189 = vmatprep.mubr.f32.mxu0 0.0
        %1190 = vmatmul.mubr.f32.gmra.mrb[0].mxu0 %v1121
        %v1191 = vpop.f32.mrb[0].mxu0
        %v1192 = vadd.f32 %v785, %v1191
        %v1193 = vpop.f32.mrb[0].mxu0
        %1194 = vdwg.mxu0
        %v1195 = vsel %vm790, %v1192, -inf
        %1196 = vmax.xlane.f32.xlu0 %v1195
        %v1197 = vpop.xlane.xlu0 %1196
        %v1198 = vsub.f32 %v1192, %v1197
        %v1199 = vmul.f32 %v1198, 1.442695
        %v1200 = vpow.pop %v1199
        %v1201 = vsel %vm790, %v1200, 0.0
        %1202 = vadd.xlane.f32.xlu0 %v1201
        %v1203 = vpop.xlane.xlu0 %1202
        %v1204 = vrcp.pop %v1203
        %v1205 = vmul.f32 %v1200, %v1204
        %1206 = vrot.lane.b32.xlu0 %v776, 48
        %v1207 = vpop.permute.xlu0 %1206
        %v1210 = vsel %vm790, %v1205, 0
        %1212 = vmatprep.subr.mxu0 0.0
        %1213 = vmatpush1.msra.mxu0 %v1207
        %1214 = vmatprep.subr.mxu0 0.0
        %1215 = vmatpush1.msra.mxu0 0.0
        %1216 = vmatprep.subr.mxu0 0.0
        %1217 = vmatpush1.msra.mxu0 0.0
        %1218 = vmatprep.subr.mxu0 0.0
        %1219 = vmatpush1.msra.mxu0 0.0
        %1220 = vmatprep.subr.mxu0 0.0
        %1221 = vmatpush1.msra.mxu0 0.0
        %1222 = vmatprep.subr.mxu0 0.0
        %1223 = vmatpush1.msra.mxu0 0.0
        %1224 = vmatprep.subr.mxu0 0.0
        %1225 = vmatpush1.msra.mxu0 0.0
        %1226 = vmatprep.subr.mxu0 0.0
        %1227 = vmatpush1.msra.mxu0 0.0
        %1228 = vmatprep.subr.mxu0 0.0
        %1229 = vmatpush1.msra.mxu0 0.0
        %1230 = vmatprep.subr.mxu0 0.0
        %1231 = vmatpush1.msra.mxu0 0.0
        %1232 = vmatprep.subr.mxu0 0.0
        %1233 = vmatpush1.msra.mxu0 0.0
        %1234 = vmatprep.subr.mxu0 0.0
        %1235 = vmatpush1.msra.mxu0 0.0
        %1236 = vmatprep.subr.mxu0 0.0
        %1237 = vmatpush1.msra.mxu0 0.0
        %1238 = vmatprep.subr.mxu0 0.0
        %1239 = vmatpush1.msra.mxu0 0.0
        %1240 = vmatprep.subr.mxu0 0.0
        %1241 = vmatpush1.msra.mxu0 0.0
        %1242 = vmatprep.subr.mxu0 0.0
        %1243 = vmatpush1.msra.mxu0 0.0
        %1244 = vmatprep.subr.mxu0 0.0
        %1245 = vmatpush1.msra.mxu0 0.0
        %1246 = vmatprep.subr.mxu0 0.0
        %1247 = vmatpush1.msra.mxu0 0.0
        %1248 = vmatprep.subr.mxu0 0.0
        %1249 = vmatpush1.msra.mxu0 0.0
        %1250 = vmatprep.subr.mxu0 0.0
        %1251 = vmatpush1.msra.mxu0 0.0
        %1252 = vmatprep.subr.mxu0 0.0
        %1253 = vmatpush1.msra.mxu0 0.0
        %1254 = vmatprep.subr.mxu0 0.0
        %1255 = vmatpush1.msra.mxu0 0.0
        %1256 = vmatprep.subr.mxu0 0.0
        %1257 = vmatpush1.msra.mxu0 0.0
        %1258 = vmatprep.subr.mxu0 0.0
        %1259 = vmatpush1.msra.mxu0 0.0
        %1260 = vmatprep.subr.mxu0 0.0
        %1261 = vmatpush1.msra.mxu0 0.0
        %1262 = vmatprep.subr.mxu0 0.0
        %1263 = vmatpush1.msra.mxu0 0.0
        %1264 = vmatprep.subr.mxu0 0.0
        %1265 = vmatpush1.msra.mxu0 0.0
        %1266 = vmatprep.subr.mxu0 0.0
        %1267 = vmatpush1.msra.mxu0 0.0
        %1268 = vmatprep.subr.mxu0 0.0
        %1269 = vmatpush1.msra.mxu0 0.0
        %1270 = vmatprep.subr.mxu0 0.0
        %1271 = vmatpush1.msra.mxu0 0.0
        %1272 = vmatprep.subr.mxu0 0.0
        %1273 = vmatpush1.msra.mxu0 0.0
        %1274 = vmatprep.subr.mxu0 0.0
        %1275 = vmatpush1.msra.mxu0 0.0
        %1276 = vmatprep.mubr.f32.mxu0 0.0
        %1277 = vmatmul.mubr.f32.gmra.mrb[0].mxu0 %v1210
        %v1278 = vpop.f32.mrb[0].mxu0
        %v1279 = vadd.f32 0.0, %v1278
        %v1280 = vpop.f32.mrb[0].mxu0
        %1281 = vdwg.mxu0
        %1282 = vrot.lane.b32.xlu0 %v776, 104
        %v1283 = vpop.permute.xlu0 %1282
        %1284 = vrot.lane.b32.xlu0 %v776, 72
        %v1285 = vpop.permute.xlu0 %1284
        %v1286 = vsel %vm790, %v1283, 0
        %v1288 = vsel %vm790, %v1285, 0
        %1290 = vmatprep.subr.mxu0 0.0
        %1291 = vmatpush1.xpose.msra.mxu0 %v1288
        %1292 = vmatprep.subr.mxu0 0.0
        %1293 = vmatpush1.xpose.msra.mxu0 0.0
        %1294 = vmatprep.subr.mxu0 0.0
        %1295 = vmatpush1.xpose.msra.mxu0 0.0
        %1296 = vmatprep.subr.mxu0 0.0
        %1297 = vmatpush1.xpose.msra.mxu0 0.0
        %1298 = vmatprep.subr.mxu0 0.0
        %1299 = vmatpush1.xpose.msra.mxu0 0.0
        %1300 = vmatprep.subr.mxu0 0.0
        %1301 = vmatpush1.xpose.msra.mxu0 0.0
        %1302 = vmatprep.subr.mxu0 0.0
        %1303 = vmatpush1.xpose.msra.mxu0 0.0
        %1304 = vmatprep.subr.mxu0 0.0
        %1305 = vmatpush1.xpose.msra.mxu0 0.0
        %1306 = vmatprep.subr.mxu0 0.0
        %1307 = vmatpush1.xpose.msra.mxu0 0.0
        %1308 = vmatprep.subr.mxu0 0.0
        %1309 = vmatpush1.xpose.msra.mxu0 0.0
        %1310 = vmatprep.subr.mxu0 0.0
        %1311 = vmatpush1.xpose.msra.mxu0 0.0
        %1312 = vmatprep.subr.mxu0 0.0
        %1313 = vmatpush1.xpose.msra.mxu0 0.0
        %1314 = vmatprep.subr.mxu0 0.0
        %1315 = vmatpush1.xpose.msra.mxu0 0.0
        %1316 = vmatprep.subr.mxu0 0.0
        %1317 = vmatpush1.xpose.msra.mxu0 0.0
        %1318 = vmatprep.subr.mxu0 0.0
        %1319 = vmatpush1.xpose.msra.mxu0 0.0
        %1320 = vmatprep.subr.mxu0 0.0
        %1321 = vmatpush1.xpose.msra.mxu0 0.0
        %1322 = vmatprep.subr.mxu0 0.0
        %1323 = vmatpush1.xpose.msra.mxu0 0.0
        %1324 = vmatprep.subr.mxu0 0.0
        %1325 = vmatpush1.xpose.msra.mxu0 0.0
        %1326 = vmatprep.subr.mxu0 0.0
        %1327 = vmatpush1.xpose.msra.mxu0 0.0
        %1328 = vmatprep.subr.mxu0 0.0
        %1329 = vmatpush1.xpose.msra.mxu0 0.0
        %1330 = vmatprep.subr.mxu0 0.0
        %1331 = vmatpush1.xpose.msra.mxu0 0.0
        %1332 = vmatprep.subr.mxu0 0.0
        %1333 = vmatpush1.xpose.msra.mxu0 0.0
        %1334 = vmatprep.subr.mxu0 0.0
        %1335 = vmatpush1.xpose.msra.mxu0 0.0
        %1336 = vmatprep.subr.mxu0 0.0
        %1337 = vmatpush1.xpose.msra.mxu0 0.0
        %1338 = vmatprep.subr.mxu0 0.0
        %1339 = vmatpush1.xpose.msra.mxu0 0.0
        %1340 = vmatprep.subr.mxu0 0.0
        %1341 = vmatpush1.xpose.msra.mxu0 0.0
        %1342 = vmatprep.subr.mxu0 0.0
        %1343 = vmatpush1.xpose.msra.mxu0 0.0
        %1344 = vmatprep.subr.mxu0 0.0
        %1345 = vmatpush1.xpose.msra.mxu0 0.0
        %1346 = vmatprep.subr.mxu0 0.0
        %1347 = vmatpush1.xpose.msra.mxu0 0.0
        %1348 = vmatprep.subr.mxu0 0.0
        %1349 = vmatpush1.xpose.msra.mxu0 0.0
        %1350 = vmatprep.subr.mxu0 0.0
        %1351 = vmatpush1.xpose.msra.mxu0 0.0
        %1352 = vmatprep.subr.mxu0 0.0
        %1353 = vmatpush1.xpose.msra.mxu0 0.0
        %1354 = vmatprep.mubr.f32.mxu0 0.0
        %1355 = vmatmul.mubr.f32.gmra.mrb[0].mxu0 %v1286
        %v1356 = vpop.f32.mrb[0].mxu0
        %v1357 = vadd.f32 %v785, %v1356
        %v1358 = vpop.f32.mrb[0].mxu0
        %1359 = vdwg.mxu0
        %v1360 = vsel %vm790, %v1357, -inf
        %1361 = vmax.xlane.f32.xlu0 %v1360
        %v1362 = vpop.xlane.xlu0 %1361
        %v1363 = vsub.f32 %v1357, %v1362
        %v1364 = vmul.f32 %v1363, 1.442695
        %v1365 = vpow.pop %v1364
        %v1366 = vsel %vm790, %v1365, 0.0
        %1367 = vadd.xlane.f32.xlu0 %v1366
        %v1368 = vpop.xlane.xlu0 %1367
        %v1369 = vrcp.pop %v1368
        %v1370 = vmul.f32 %v1365, %v1369
        %1371 = vrot.lane.b32.xlu0 %v776, 40
        %v1372 = vpop.permute.xlu0 %1371
        %v1375 = vsel %vm790, %v1370, 0
        %1377 = vmatprep.subr.mxu0 0.0
        %1378 = vmatpush1.msra.mxu0 %v1372
        %1379 = vmatprep.subr.mxu0 0.0
        %1380 = vmatpush1.msra.mxu0 0.0
        %1381 = vmatprep.subr.mxu0 0.0
        %1382 = vmatpush1.msra.mxu0 0.0
        %1383 = vmatprep.subr.mxu0 0.0
        %1384 = vmatpush1.msra.mxu0 0.0
        %1385 = vmatprep.subr.mxu0 0.0
        %1386 = vmatpush1.msra.mxu0 0.0
        %1387 = vmatprep.subr.mxu0 0.0
        %1388 = vmatpush1.msra.mxu0 0.0
        %1389 = vmatprep.subr.mxu0 0.0
        %1390 = vmatpush1.msra.mxu0 0.0
        %1391 = vmatprep.subr.mxu0 0.0
        %1392 = vmatpush1.msra.mxu0 0.0
        %1393 = vmatprep.subr.mxu0 0.0
        %1394 = vmatpush1.msra.mxu0 0.0
        %1395 = vmatprep.subr.mxu0 0.0
        %1396 = vmatpush1.msra.mxu0 0.0
        %1397 = vmatprep.subr.mxu0 0.0
        %1398 = vmatpush1.msra.mxu0 0.0
        %1399 = vmatprep.subr.mxu0 0.0
        %1400 = vmatpush1.msra.mxu0 0.0
        %1401 = vmatprep.subr.mxu0 0.0
        %1402 = vmatpush1.msra.mxu0 0.0
        %1403 = vmatprep.subr.mxu0 0.0
        %1404 = vmatpush1.msra.mxu0 0.0
        %1405 = vmatprep.subr.mxu0 0.0
        %1406 = vmatpush1.msra.mxu0 0.0
        %1407 = vmatprep.subr.mxu0 0.0
        %1408 = vmatpush1.msra.mxu0 0.0
        %1409 = vmatprep.subr.mxu0 0.0
        %1410 = vmatpush1.msra.mxu0 0.0
        %1411 = vmatprep.subr.mxu0 0.0
        %1412 = vmatpush1.msra.mxu0 0.0
        %1413 = vmatprep.subr.mxu0 0.0
        %1414 = vmatpush1.msra.mxu0 0.0
        %1415 = vmatprep.subr.mxu0 0.0
        %1416 = vmatpush1.msra.mxu0 0.0
        %1417 = vmatprep.subr.mxu0 0.0
        %1418 = vmatpush1.msra.mxu0 0.0
        %1419 = vmatprep.subr.mxu0 0.0
        %1420 = vmatpush1.msra.mxu0 0.0
        %1421 = vmatprep.subr.mxu0 0.0
        %1422 = vmatpush1.msra.mxu0 0.0
        %1423 = vmatprep.subr.mxu0 0.0
        %1424 = vmatpush1.msra.mxu0 0.0
        %1425 = vmatprep.subr.mxu0 0.0
        %1426 = vmatpush1.msra.mxu0 0.0
        %1427 = vmatprep.subr.mxu0 0.0
        %1428 = vmatpush1.msra.mxu0 0.0
        %1429 = vmatprep.subr.mxu0 0.0
        %1430 = vmatpush1.msra.mxu0 0.0
        %1431 = vmatprep.subr.mxu0 0.0
        %1432 = vmatpush1.msra.mxu0 0.0
        %1433 = vmatprep.subr.mxu0 0.0
        %1434 = vmatpush1.msra.mxu0 0.0
        %1435 = vmatprep.subr.mxu0 0.0
        %1436 = vmatpush1.msra.mxu0 0.0
        %1437 = vmatprep.subr.mxu0 0.0
        %1438 = vmatpush1.msra.mxu0 0.0
        %1439 = vmatprep.subr.mxu0 0.0
        %1440 = vmatpush1.msra.mxu0 0.0
        %1441 = vmatprep.mubr.f32.mxu0 0.0
        %1442 = vmatmul.mubr.f32.gmra.mrb[0].mxu0 %v1375
        %v1443 = vpop.f32.mrb[0].mxu0
        %v1444 = vadd.f32 0.0, %v1443
        %v1445 = vpop.f32.mrb[0].mxu0
        %1446 = vdwg.mxu0
        %1448 = vrot.lane.b32.xlu0 %v1114, 8
        %v1449 = vpop.permute.xlu0 %1448
        %1452 = vrot.lane.b32.xlu0 %v1279, 16
        %v1453 = vpop.permute.xlu0 %1452
        %1456 = vrot.lane.b32.xlu0 %v1444, 24
        %v1457 = vpop.permute.xlu0 %1456
        %v1459 = vsel %vm790, %v949, %v1449
        %vm1460 = vcmask 130048
        %v1461 = vsel %vm1460, %v1459, %v1453
        %vm1462 = vcmask 195584
        %v1463 = vsel %vm1462, %v1461, %v1457
        %v1464 = vpack.c.bf16 %v1463, %v1463
        %v1465 = vld [vmem:[%s595] sm:$0xf]
        %v1466 = vld [vmem:[%s595 + $0x4] sm:$0xf]
        %v1467 = vld [vmem:[%s595 + $0x8] sm:$0xf]
        %v1468 = vld [vmem:[%s595 + $0xc] sm:$0xf]
        %v1469 = vlaneseq
        %v1470 = vshrl.u32 %v1469, 7
        %v1471 = vsub.s32 4, %v1470
        %v1472 = vrot.slane %v613, %v1471
        %v1477 = vunpack.c.l.b16 %v1465
        %v1478 = vunpack.c.l.b16 %v1466
        %v1479 = vunpack.c.l.b16 %v1467
        %v1480 = vunpack.c.l.b16 %v1468
        %v1481 = vpack.c.b16 %v1478, %v1477
        %v1482 = vpack.c.b16 %v1480, %v1479
        %vm1485 = vcmask 261120
        %v1487 = vsel %vm1485, %v1464, 0
        %1489 = vmatprep.subr.bf16.mxu0 0
        %1490 = vmatpush1.bf16.msra.mxu0 %v1481
        %1491 = vmatprep.subr.bf16.mxu0 0
        %1492 = vmatpush1.bf16.msra.mxu0 %v1482
        %1493 = vmatprep.subr.bf16.mxu0 0
        %1494 = vmatpush1.bf16.msra.mxu0 0
        %1495 = vmatprep.subr.bf16.mxu0 0
        %1496 = vmatpush1.bf16.msra.mxu0 0
        %1497 = vmatprep.subr.bf16.mxu0 0
        %1498 = vmatpush1.bf16.msra.mxu0 0
        %1499 = vmatprep.subr.bf16.mxu0 0
        %1500 = vmatpush1.bf16.msra.mxu0 0
        %1501 = vmatprep.subr.bf16.mxu0 0
        %1502 = vmatpush1.bf16.msra.mxu0 0
        %1503 = vmatprep.subr.bf16.mxu0 0
        %1504 = vmatpush1.bf16.msra.mxu0 0
        %1505 = vmatprep.subr.bf16.mxu0 0
        %1506 = vmatpush1.bf16.msra.mxu0 0
        %1507 = vmatprep.subr.bf16.mxu0 0
        %1508 = vmatpush1.bf16.msra.mxu0 0
        %1509 = vmatprep.subr.bf16.mxu0 0
        %1510 = vmatpush1.bf16.msra.mxu0 0
        %1511 = vmatprep.subr.bf16.mxu0 0
        %1512 = vmatpush1.bf16.msra.mxu0 0
        %1513 = vmatprep.subr.bf16.mxu0 0
        %1514 = vmatpush1.bf16.msra.mxu0 0
        %1515 = vmatprep.subr.bf16.mxu0 0
        %1516 = vmatpush1.bf16.msra.mxu0 0
        %1517 = vmatprep.subr.bf16.mxu0 0
        %1518 = vmatpush1.bf16.msra.mxu0 0
        %1519 = vmatprep.subr.bf16.mxu0 0
        %1520 = vmatpush1.bf16.msra.mxu0 0
        %1521 = vmatprep.mubr.bf16.mxu0 0
        %1522 = vmatmul.mubr.bf16.gmra.mrb[0].mxu0 %v1487
        %v1523 = vpop.f32.mrb[0].mxu0
        %v1524 = vadd.f32 %v1472, %v1523
        %v1525 = vpop.f32.mrb[0].mxu0
        %v1526 = vpop.f32.mrb[0].mxu0
        %v1527 = vpop.f32.mrb[0].mxu0
        %1528 = vdwg.mxu0
        %v1529 = vadd.f32 %v607, %v1524
        %1530 = vadd.xlane.f32.xlu0 %v1529
        %v1531 = vpop.xlane.xlu0 %1530
        %v1532 = vmul.f32 %v1531, 0.03125
        %v1533 = vsub.f32 %v1529, %v1532
        %v1534 = vmul.f32 %v1533, %v612
        %v1535 = vmul.f32 %v1534, %v1534
        %1536 = vadd.xlane.f32.xlu0 %v1535
        %v1537 = vpop.xlane.xlu0 %1536
        %v1538 = vmul.f32 %v1537, 0.03125
        %v1539 = vadd.f32 %v1538, 1e-05
        %v1540 = vrsqrt.pop %v1539
        %v1541 = vmul.f32 %v1534, %v1540
        %v1542 = vlaneseq
        %v1543 = vshrl.u32 %v1542, 7
        %v1544 = vsub.s32 2, %v1543
        %v1545 = vrot.slane %v613, %v1544
        %v1546 = vmul.f32 %v1541, %v1545
        %v1547 = vlaneseq
        %v1548 = vshrl.u32 %v1547, 7
        %v1549 = vsub.s32 3, %v1548
        %v1550 = vrot.slane %v613, %v1549
        %v1551 = vadd.f32 %v1546, %v1550
        %v1552 = vpack.c.bf16 %v1551, %v1551
        %v1553 = vld [vmem:[%s499] sm:$0xff]
        %v1554 = vld [vmem:[%s499 + $0x8] sm:$0xff]
        %v1555 = vld [vmem:[%s499 + $0x10] sm:$0xff]
        %v1556 = vld [vmem:[%s499 + $0x18] sm:$0xff]
        %v1557 = vld [vmem:[%s499 + $0x20] sm:$0xff]
        %v1558 = vld [vmem:[%s499 + $0x28] sm:$0xff]
        %v1559 = vld [vmem:[%s499 + $0x30] sm:$0xff]
        %v1560 = vld [vmem:[%s499 + $0x38] sm:$0xff]
        %v1561 = vld [vmem:[%s499 + $0x40] sm:$0xff]
        %v1562 = vld [vmem:[%s499 + $0x48] sm:$0xff]
        %v1563 = vld [vmem:[%s499 + $0x50] sm:$0xff]
        %v1564 = vld [vmem:[%s499 + $0x58] sm:$0xff]
        %v1565 = vld [vmem:[%s499 + $0x60] sm:$0xff]
        %v1566 = vld [vmem:[%s499 + $0x68] sm:$0xff]
        %v1567 = vld [vmem:[%s499 + $0x70] sm:$0xff]
        %v1568 = vld [vmem:[%s499 + $0x78] sm:$0xff]
        %v1569 = vld [vmem:[%s599] sm:$0x3]
        %v1571 = vlaneseq
        %v1572 = vshrl.u32 %v1571, 7
        %v1573 = vsub.s32 0, %v1572
        %v1574 = vrot.slane %v1569, %v1573
        %v1575 = vlaneseq
        %v1576 = vshrl.u32 %v1575, 7
        %v1577 = vsub.s32 1, %v1576
        %v1578 = vrot.slane %v1569, %v1577
        %v1597 = vunpack.c.l.b16 %v1553
        %v1598 = vunpack.c.h.b16 %v1553
        %v1599 = vunpack.c.l.b16 %v1554
        %v1600 = vunpack.c.h.b16 %v1554
        %v1601 = vunpack.c.l.b16 %v1555
        %v1602 = vunpack.c.h.b16 %v1555
        %v1603 = vunpack.c.l.b16 %v1556
        %v1604 = vunpack.c.h.b16 %v1556
        %v1605 = vunpack.c.l.b16 %v1557
        %v1606 = vunpack.c.h.b16 %v1557
        %v1607 = vunpack.c.l.b16 %v1558
        %v1608 = vunpack.c.h.b16 %v1558
        %v1609 = vunpack.c.l.b16 %v1559
        %v1610 = vunpack.c.h.b16 %v1559
        %v1611 = vunpack.c.l.b16 %v1560
        %v1612 = vunpack.c.h.b16 %v1560
        %v1613 = vunpack.c.l.b16 %v1561
        %v1614 = vunpack.c.h.b16 %v1561
        %v1615 = vunpack.c.l.b16 %v1562
        %v1616 = vunpack.c.h.b16 %v1562
        %v1617 = vunpack.c.l.b16 %v1563
        %v1618 = vunpack.c.h.b16 %v1563
        %v1619 = vunpack.c.l.b16 %v1564
        %v1620 = vunpack.c.h.b16 %v1564
        %v1621 = vunpack.c.l.b16 %v1565
        %v1622 = vunpack.c.h.b16 %v1565
        %v1623 = vunpack.c.l.b16 %v1566
        %v1624 = vunpack.c.h.b16 %v1566
        %v1625 = vunpack.c.l.b16 %v1567
        %v1626 = vunpack.c.h.b16 %v1567
        %v1627 = vunpack.c.l.b16 %v1568
        %v1628 = vunpack.c.h.b16 %v1568
        %v1629 = vpack.c.b16 %v1599, %v1597
        %v1630 = vpack.c.b16 %v1600, %v1598
        %v1631 = vpack.c.b16 %v1603, %v1601
        %v1632 = vpack.c.b16 %v1604, %v1602
        %v1633 = vpack.c.b16 %v1607, %v1605
        %v1634 = vpack.c.b16 %v1608, %v1606
        %v1635 = vpack.c.b16 %v1611, %v1609
        %v1636 = vpack.c.b16 %v1612, %v1610
        %v1637 = vpack.c.b16 %v1615, %v1613
        %v1638 = vpack.c.b16 %v1616, %v1614
        %v1639 = vpack.c.b16 %v1619, %v1617
        %v1640 = vpack.c.b16 %v1620, %v1618
        %v1641 = vpack.c.b16 %v1623, %v1621
        %v1642 = vpack.c.b16 %v1624, %v1622
        %v1643 = vpack.c.b16 %v1627, %v1625
        %v1644 = vpack.c.b16 %v1628, %v1626
        %1661 = vmatprep.subr.bf16.mxu0 %v1630
        %1662 = vmatpush1.bf16.msra.mxu0 %v1629
        %1663 = vmatprep.subr.bf16.mxu0 %v1632
        %1664 = vmatpush1.bf16.msra.mxu0 %v1631
        %1665 = vmatprep.subr.bf16.mxu0 %v1634
        %1666 = vmatpush1.bf16.msra.mxu0 %v1633
        %1667 = vmatprep.subr.bf16.mxu0 %v1636
        %1668 = vmatpush1.bf16.msra.mxu0 %v1635
        %1669 = vmatprep.subr.bf16.mxu0 %v1638
        %1670 = vmatpush1.bf16.msra.mxu0 %v1637
        %1671 = vmatprep.subr.bf16.mxu0 %v1640
        %1672 = vmatpush1.bf16.msra.mxu0 %v1639
        %1673 = vmatprep.subr.bf16.mxu0 %v1642
        %1674 = vmatpush1.bf16.msra.mxu0 %v1641
        %1675 = vmatprep.subr.bf16.mxu0 %v1644
        %1676 = vmatpush1.bf16.msra.mxu0 %v1643
        %1677 = vmatprep.subr.bf16.mxu0 0
        %1678 = vmatpush1.bf16.msra.mxu0 0
        %1679 = vmatprep.subr.bf16.mxu0 0
        %1680 = vmatpush1.bf16.msra.mxu0 0
        %1681 = vmatprep.subr.bf16.mxu0 0
        %1682 = vmatpush1.bf16.msra.mxu0 0
        %1683 = vmatprep.subr.bf16.mxu0 0
        %1684 = vmatpush1.bf16.msra.mxu0 0
        %1685 = vmatprep.subr.bf16.mxu0 0
        %1686 = vmatpush1.bf16.msra.mxu0 0
        %1687 = vmatprep.subr.bf16.mxu0 0
        %1688 = vmatpush1.bf16.msra.mxu0 0
        %1689 = vmatprep.subr.bf16.mxu0 0
        %1690 = vmatpush1.bf16.msra.mxu0 0
        %1691 = vmatprep.subr.bf16.mxu0 0
        %1692 = vmatpush1.bf16.msra.mxu0 0
        %1693 = vmatprep.mubr.bf16.mxu0 0
        %1694 = vmatmul.mubr.bf16.gmra.mrb[0].mxu0 %v1552
        %v1695 = vpop.f32.mrb[0].mxu0
        %v1696 = vadd.f32 %v1574, %v1695
        %v1697 = vpop.f32.mrb[0].mxu0
        %v1698 = vadd.f32 %v1578, %v1697
        %v1699 = vpop.f32.mrb[0].mxu0
        %v1700 = vpop.f32.mrb[0].mxu0
        %1701 = vdwg.mxu0
        %v1702 = vmul.f32 %v1696, 0.5
        %v1703 = vmul.f32 %v1698, 0.5
        %v1704 = vmul.f32 %v1696, 0.044715
        %v1705 = vmul.f32 %v1698, 0.044715
        %v1706 = vmul.f32 %v1704, %v1696
        %v1707 = vmul.f32 %v1705, %v1698
        %v1708 = vmul.f32 %v1706, %v1696
        %v1709 = vmul.f32 %v1707, %v1698
        %v1710 = vadd.f32 %v1696, %v1708
        %v1711 = vadd.f32 %v1698, %v1709
        %v1712 = vmul.f32 %v1710, 0.7978846
        %v1713 = vmul.f32 %v1711, 0.7978846
        %v1714 = vtanh.pop %v1712
        %v1715 = vtanh.pop %v1713
        %v1716 = vadd.f32 %v1714, 1.0
        %v1717 = vadd.f32 %v1715, 1.0
        %v1718 = vmul.f32 %v1702, %v1716
        %v1719 = vmul.f32 %v1703, %v1717
        %v1720 = vpack.c.bf16 %v1718, %v1718
        %v1721 = vpack.c.bf16 %v1719, %v1719
        %v1722 = vld [vmem:[%s508] sm:$0xf]
        %v1723 = vld [vmem:[%s508 + $0x4] sm:$0xf]
        %v1724 = vld [vmem:[%s508 + $0x8] sm:$0xf]
        %v1725 = vld [vmem:[%s508 + $0xc] sm:$0xf]
        %v1726 = vld [vmem:[%s508 + $0x10] sm:$0xf]
        %v1727 = vld [vmem:[%s508 + $0x14] sm:$0xf]
        %v1728 = vld [vmem:[%s508 + $0x18] sm:$0xf]
        %v1729 = vld [vmem:[%s508 + $0x1c] sm:$0xf]
        %v1730 = vld [vmem:[%s508 + $0x20] sm:$0xf]
        %v1731 = vld [vmem:[%s508 + $0x24] sm:$0xf]
        %v1732 = vld [vmem:[%s508 + $0x28] sm:$0xf]
        %v1733 = vld [vmem:[%s508 + $0x2c] sm:$0xf]
        %v1734 = vld [vmem:[%s508 + $0x30] sm:$0xf]
        %v1735 = vld [vmem:[%s508 + $0x34] sm:$0xf]
        %v1736 = vld [vmem:[%s508 + $0x38] sm:$0xf]
        %v1737 = vld [vmem:[%s508 + $0x3c] sm:$0xf]
        %v1738 = vld [vmem:[%s508 + $0x40] sm:$0xf]
        %v1739 = vld [vmem:[%s508 + $0x44] sm:$0xf]
        %v1740 = vld [vmem:[%s508 + $0x48] sm:$0xf]
        %v1741 = vld [vmem:[%s508 + $0x4c] sm:$0xf]
        %v1742 = vld [vmem:[%s508 + $0x50] sm:$0xf]
        %v1743 = vld [vmem:[%s508 + $0x54] sm:$0xf]
        %v1744 = vld [vmem:[%s508 + $0x58] sm:$0xf]
        %v1745 = vld [vmem:[%s508 + $0x5c] sm:$0xf]
        %v1746 = vld [vmem:[%s508 + $0x60] sm:$0xf]
        %v1747 = vld [vmem:[%s508 + $0x64] sm:$0xf]
        %v1748 = vld [vmem:[%s508 + $0x68] sm:$0xf]
        %v1749 = vld [vmem:[%s508 + $0x6c] sm:$0xf]
        %v1750 = vld [vmem:[%s508 + $0x70] sm:$0xf]
        %v1751 = vld [vmem:[%s508 + $0x74] sm:$0xf]
        %v1752 = vld [vmem:[%s508 + $0x78] sm:$0xf]
        %v1753 = vld [vmem:[%s508 + $0x7c] sm:$0xf]
        %v1754 = vlaneseq
        %v1755 = vshrl.u32 %v1754, 7
        %v1756 = vsub.s32 5, %v1755
        %v1757 = vrot.slane %v613, %v1756
        %v1790 = vunpack.c.l.b16 %v1722
        %v1791 = vunpack.c.l.b16 %v1723
        %v1792 = vunpack.c.l.b16 %v1724
        %v1793 = vunpack.c.l.b16 %v1725
        %v1794 = vunpack.c.l.b16 %v1726
        %v1795 = vunpack.c.l.b16 %v1727
        %v1796 = vunpack.c.l.b16 %v1728
        %v1797 = vunpack.c.l.b16 %v1729
        %v1798 = vunpack.c.l.b16 %v1730
        %v1799 = vunpack.c.l.b16 %v1731
        %v1800 = vunpack.c.l.b16 %v1732
        %v1801 = vunpack.c.l.b16 %v1733
        %v1802 = vunpack.c.l.b16 %v1734
        %v1803 = vunpack.c.l.b16 %v1735
        %v1804 = vunpack.c.l.b16 %v1736
        %v1805 = vunpack.c.l.b16 %v1737
        %v1806 = vunpack.c.l.b16 %v1738
        %v1807 = vunpack.c.l.b16 %v1739
        %v1808 = vunpack.c.l.b16 %v1740
        %v1809 = vunpack.c.l.b16 %v1741
        %v1810 = vunpack.c.l.b16 %v1742
        %v1811 = vunpack.c.l.b16 %v1743
        %v1812 = vunpack.c.l.b16 %v1744
        %v1813 = vunpack.c.l.b16 %v1745
        %v1814 = vunpack.c.l.b16 %v1746
        %v1815 = vunpack.c.l.b16 %v1747
        %v1816 = vunpack.c.l.b16 %v1748
        %v1817 = vunpack.c.l.b16 %v1749
        %v1818 = vunpack.c.l.b16 %v1750
        %v1819 = vunpack.c.l.b16 %v1751
        %v1820 = vunpack.c.l.b16 %v1752
        %v1821 = vunpack.c.l.b16 %v1753
        %v1822 = vpack.c.b16 %v1791, %v1790
        %v1823 = vpack.c.b16 %v1793, %v1792
        %v1824 = vpack.c.b16 %v1795, %v1794
        %v1825 = vpack.c.b16 %v1797, %v1796
        %v1826 = vpack.c.b16 %v1799, %v1798
        %v1827 = vpack.c.b16 %v1801, %v1800
        %v1828 = vpack.c.b16 %v1803, %v1802
        %v1829 = vpack.c.b16 %v1805, %v1804
        %v1830 = vpack.c.b16 %v1807, %v1806
        %v1831 = vpack.c.b16 %v1809, %v1808
        %v1832 = vpack.c.b16 %v1811, %v1810
        %v1833 = vpack.c.b16 %v1813, %v1812
        %v1834 = vpack.c.b16 %v1815, %v1814
        %v1835 = vpack.c.b16 %v1817, %v1816
        %v1836 = vpack.c.b16 %v1819, %v1818
        %v1837 = vpack.c.b16 %v1821, %v1820
        %1854 = vmatprep.subr.bf16.mxu0 0
        %1855 = vmatpush1.bf16.msra.mxu0 %v1822
        %1856 = vmatprep.subr.bf16.mxu0 0
        %1857 = vmatpush1.bf16.msra.mxu0 %v1823
        %1858 = vmatprep.subr.bf16.mxu0 0
        %1859 = vmatpush1.bf16.msra.mxu0 %v1824
        %1860 = vmatprep.subr.bf16.mxu0 0
        %1861 = vmatpush1.bf16.msra.mxu0 %v1825
        %1862 = vmatprep.subr.bf16.mxu0 0
        %1863 = vmatpush1.bf16.msra.mxu0 %v1826
        %1864 = vmatprep.subr.bf16.mxu0 0
        %1865 = vmatpush1.bf16.msra.mxu0 %v1827
        %1866 = vmatprep.subr.bf16.mxu0 0
        %1867 = vmatpush1.bf16.msra.mxu0 %v1828
        %1868 = vmatprep.subr.bf16.mxu0 0
        %1869 = vmatpush1.bf16.msra.mxu0 %v1829
        %1870 = vmatprep.subr.bf16.mxu0 0
        %1871 = vmatpush1.bf16.msra.mxu0 %v1830
        %1872 = vmatprep.subr.bf16.mxu0 0
        %1873 = vmatpush1.bf16.msra.mxu0 %v1831
        %1874 = vmatprep.subr.bf16.mxu0 0
        %1875 = vmatpush1.bf16.msra.mxu0 %v1832
        %1876 = vmatprep.subr.bf16.mxu0 0
        %1877 = vmatpush1.bf16.msra.mxu0 %v1833
        %1878 = vmatprep.subr.bf16.mxu0 0
        %1879 = vmatpush1.bf16.msra.mxu0 %v1834
        %1880 = vmatprep.subr.bf16.mxu0 0
        %1881 = vmatpush1.bf16.msra.mxu0 %v1835
        %1882 = vmatprep.subr.bf16.mxu0 0
        %1883 = vmatpush1.bf16.msra.mxu0 %v1836
        %1884 = vmatprep.subr.bf16.mxu0 0
        %1885 = vmatpush1.bf16.msra.mxu0 %v1837
        %1886 = vmatprep.mubr.bf16.mxu0 %v1721
        %1887 = vmatmul.mubr.bf16.gmra.mrb[0].mxu0 %v1720
        %v1888 = vpop.f32.mrb[0].mxu0
        %v1889 = vadd.f32 %v1757, %v1888
        %v1890 = vpop.f32.mrb[0].mxu0
        %v1891 = vpop.f32.mrb[0].mxu0
        %v1892 = vpop.f32.mrb[0].mxu0
        %1893 = vdwg.mxu0
        %v1894 = vadd.f32 %v1529, %v1889
        %p1895 = scmp.lt.s32.totalorder %s36, 1
        // Predicated region
        $region85: #{tpu_custom_call.1} parent=59 // pred_check
          %p1896 = pneg %p1895
        $region86: #{tpu_custom_call.1} parent=59 // pred_check_branch
          %1898 = sbr.rel (%p1896) target = $region88
        $region87: #{tpu_custom_call.1} parent=59 // pred_region
          %1899 = vst [vmem:[%s579] sm:$0xff] %v1894
        $region88: #{tpu_custom_call.1} parent=59 // pred_fallthru
          _
        %p1900 = scmp.eq.s32.totalorder %s36, 1
        // Predicated region
        $region89: #{tpu_custom_call.1} parent=59 // pred_check
          %p1901 = pneg %p1900
        $region90: #{tpu_custom_call.1} parent=59 // pred_check_branch
          %1903 = sbr.rel (%p1901) target = $region92
        $region91: #{tpu_custom_call.1} parent=59 // pred_region
          %v1904 = vld [vmem:[#allocation2] sm:$0x3]
          %1905 = vadd.xlane.f32.xlu0 %v1894
          %v1906 = vpop.xlane.xlu0 %1905
          %v1907 = vmul.f32 %v1906, 0.03125
          %v1908 = vsub.f32 %v1894, %v1907
          %v1909 = vmul.f32 %v1908, %v612
          %v1910 = vmul.f32 %v1909, %v1909
          %1911 = vadd.xlane.f32.xlu0 %v1910
          %v1912 = vpop.xlane.xlu0 %1911
          %v1913 = vmul.f32 %v1912, 0.03125
          %v1914 = vadd.f32 %v1913, 1e-05
          %v1915 = vrsqrt.pop %v1914
          %v1916 = vmul.f32 %v1909, %v1915
          %v1917 = vlaneseq
          %v1918 = vshrl.u32 %v1917, 7
          %v1919 = vsub.s32 0, %v1918
          %v1920 = vrot.slane %v1904, %v1919
          %v1921 = vmul.f32 %v1916, %v1920
          %v1922 = vlaneseq
          %v1923 = vshrl.u32 %v1922, 7
          %v1924 = vsub.s32 1, %v1923
          %v1925 = vrot.slane %v1904, %v1924
          %v1926 = vadd.f32 %v1921, %v1925
          %1927 = vst [vmem:[%s579] sm:$0xff] %v1926
        $region92: #{tpu_custom_call.1} parent=59 // pred_fallthru
          _
        %s1928 = sand.u32 %s306, 1
        %s1929 = scalar_lea.sflag [#allocation4], %s1928
        %s1930 = sand.u32 %s306, 1
        %s1931 = smul.addr %s1930, 8
        %s1932 = scalar_lea.vmem [#allocation11], %s1931
        // Predicated region
        $region93: #{tpu_custom_call.1} parent=59 // pred_check
          %p1933 = pneg %p316
        $region94: #{tpu_custom_call.1} parent=59 // pred_check_branch
          %1935 = sbr.rel (%p1933) target = $region96
        $region95: #{tpu_custom_call.1} parent=59 // pred_region
          %s1937 = ssub.s32 128, 128
          %1938 = vsyncadd %s1929, %s1937
          %s1939 = smul.addr %s35, 128
          %s1940 = scalar_lea.hbm %s10, %s1939
          %s1942 = sshll.u32 %s1932, 4
          %s1943 = int_to_ptr.vmem [resolvable:$true] %s1942
          %1945 = dma.vmem_to_hbm [thread:$0]  %s1943, 128, %s1940, %s1929
        $region96: #{tpu_custom_call.1} parent=59 // pred_fallthru
          _
      $region60: #{tpu_custom_call.1} parent=5 // pred_fallthru
        _
      %p1946 = scmp.le.s32.totalorder 2, %s26
      // Predicated region
      $region97: #{tpu_custom_call.1} parent=5 // pred_check
        %p1947 = pneg %p1946
      $region98: #{tpu_custom_call.1} parent=5 // pred_check_branch
        %1949 = sbr.rel (%p1947) target = $region100
      $region99: #{tpu_custom_call.1} parent=5 // pred_region
        %s1950 = ssub.s32 %s26, 2
        // Predicated region
        $region101: #{tpu_custom_call.1} parent=99 // pred_check
          %p1951 = pneg %p322
        $region102: #{tpu_custom_call.1} parent=99 // pred_check_branch
          %1953 = sbr.rel (%p1951) target = $region104
        $region103: #{tpu_custom_call.1} parent=99 // pred_region
          %s1954 = sand.u32 %s307, 1
          %s1955 = scalar_lea.sflag [#allocation4], %s1954
          %s1956 = sand.u32 %s307, 1
          %s1957 = smul.addr %s1956, 8
          %s1958 = scalar_lea.vmem [#allocation11], %s1957
          %1959 = dma.done %s1955, 128
        $region104: #{tpu_custom_call.1} parent=99 // pred_fallthru
          _
      $region100: #{tpu_custom_call.1} parent=5 // pred_fallthru
        _
    $region6: #{tpu_custom_call.1} parent=1 // loop_footer
      %s30 = sadd.s32 1, %s26
    $region7: #{tpu_custom_call.1} parent=1 // loop_footer_branch
      %25 = sbr.rel target = $region3
    $region8: #{tpu_custom_call.1} parent=1 // loop_exit
      _
    %1960 = vsyncpa [#allocation3], 1
    %s1961 = scalar_lea.sflag [#allocation3], 1
    %1962 = vsyncpa %s1961, 1
    %1963 = vsyncpa [#allocation6], 1
    %s1964 = scalar_lea.sflag [#allocation6], 1
    %1965 = vsyncpa %s1964, 1
    %1966 = vsyncpa [#allocation9], 1
    %s1967 = scalar_lea.sflag [#allocation9], 1
    %1968 = vsyncpa %s1967, 1
    %1969 = vsyncpa [#allocation4], 1
    %s1970 = scalar_lea.sflag [#allocation4], 1
    %1971 = vsyncpa %s1970, 1

</llo_original>
